<compile_context>
chip_gen: v5e
topology: v5e:2x2
jax: 0.10.0
libtpu: 0.0.40
codegen_flags: <defaults>
</compile_context>

<pallas_src>
import functools

import jax
import jax.numpy as jnp
from jax.experimental import pallas as pl
from jax.experimental.pallas import tpu as pltpu

FEATURE_DIM = 1280
ADAPTER_DIM = 64
NUM_CLASSES = 8
LANE_OUT = 128  # lane-dense (padded) classifier width


def _head_kernel(x_ref, wd_ref, bd_ref, wuc_ref, wc_ref, bf_ref,
                 out_ref, acc_ref, *, hw, inv_hw):
    """Grid = (batch_tiles, hw_tiles); hw axis is a streamed reduction."""
    k = pl.program_id(1)
    n_hw = pl.num_programs(1)
    t_hw = x_ref.shape[1]

    @pl.when(k == 0)
    def _():
        acc_ref[...] = jnp.zeros_like(acc_ref)

    def accumulate(masked):
        x = x_ref[...]                                       # [bB, t_hw, 1280] (bf16/f32)
        if masked:
            # Zero out rows past the true HW extent in the (padded) tail block.
            row = jax.lax.broadcasted_iota(jnp.int32, (1, t_hw, 1), 1)
            valid = (k * t_hw + row) < hw
            x = jnp.where(valid, x, jnp.zeros((), x.dtype))
        # Streamed global-average-pool: accumulate the spatial sum in float32.
        acc_ref[...] += jnp.sum(x, axis=1, dtype=jnp.float32)

    if hw % t_hw == 0:
        accumulate(masked=False)
    else:
        @pl.when(k < n_hw - 1)
        def _():
            accumulate(masked=False)

        @pl.when(k == n_hw - 1)
        def _():
            accumulate(masked=True)

    @pl.when(k == n_hw - 1)
    def _():
        pooled_f32 = acc_ref[...] * inv_hw                   # [bB, 1280] f32
        pooled = pooled_f32.astype(jnp.bfloat16)

        # Adapter down-projection + ReLU (bf16 x bf16 -> f32 on the MXU).
        h = jnp.dot(pooled, wd_ref[...], preferred_element_type=jnp.float32)
        h = jnp.maximum(h + bd_ref[...], 0.0).astype(jnp.bfloat16)   # [bB, 64]

        # Folded (up_project -> classifier) path + residual-through-classifier
        # path + folded biases.  Dropout(p=0.5) is identity in eval mode.
        logits = jnp.dot(h, wuc_ref[...], preferred_element_type=jnp.float32)
        logits += jnp.dot(pooled, wc_ref[...], preferred_element_type=jnp.float32)
        out_ref[...] = logits + bf_ref[...]                  # [bB, 128] f32


def _round_up(x, m):
    return ((x + m - 1) // m) * m


def _x_pair_budget_bytes():
    """Per-generation budget for the double-buffered feature-map tile pair."""
    try:
        kind = jax.devices()[0].device_kind.lower()
    except Exception:  # pragma: no cover - defensive
        kind = ""
    if "v5 lite" in kind or "v5e" in kind or "v5lite" in kind:
        return 10 << 20          # v5e: 16 MiB default scoped VMEM -> stay well under
    if "v6" in kind:
        return 18 << 20          # v6e: 32 MiB default scoped, 128 MiB physical
    if "7" in kind:
        return 20 << 20          # v7x: 64 MiB physical per TC, 3.2 TB/s HBM
    return 12 << 20              # unknown generation: conservative


def _choose_tiles(B, HW, elem_bytes, pair_budget):
    # Batch tile: multiple of 8 (sublane-aligned output block), <= 32, and at
    # most ~B/2 so the "parallel" batch axis has >= 2 steps when possible
    # (keeps both v7x TensorCores streaming).  For B <= 8 the whole batch is one
    # block (block_shape == full dim satisfies the (8,128) rule).
    if B <= 8:
        bB = B
    else:
        bB = min(32, max(8, ((B // 2) // 8) * 8))
    # HW tile: largest multiple of 8 whose double-buffered x tile fits the
    # budget.  The grid uses pl.cdiv + in-kernel tail masking, so the tile size
    # is a free parameter (works for HW = 49, 361, ...).
    max_t = pair_budget // (2 * bB * FEATURE_DIM * elem_bytes)
    max_t = max(8, (max_t // 8) * 8)
    tHW = HW if HW <= max_t else max_t
    return bB, tHW


def prepare_head_params(p):
    """One-time parameter prep: pad the classifier to 128 lanes, constant-fold
    the adapter up-projection into it, and store weights in bf16."""
    wc_pad = jnp.zeros((FEATURE_DIM, LANE_OUT), jnp.float32).at[:, :NUM_CLASSES].set(p["wc"])
    bc_pad = jnp.zeros((1, LANE_OUT), jnp.float32).at[:, :NUM_CLASSES].set(p["bc"])
    hi = jax.lax.Precision.HIGHEST
    wuc = jnp.dot(p["wu"], wc_pad, precision=hi)               # [64, 128]
    b_fold = jnp.dot(p["bu"], wc_pad, precision=hi) + bc_pad   # [1, 128]
    return {
        "wd": p["wd"].astype(jnp.bfloat16),
        "bd": p["bd"].astype(jnp.float32),
        "wuc": wuc.astype(jnp.bfloat16),
        "wc_pad": wc_pad.astype(jnp.bfloat16),
        "b_fold": b_fold.astype(jnp.float32),
    }


def efficientnet_adapter_head(feat_nhwc, head_params, *, pair_budget_bytes=None):
    """feat_nhwc: [B, H, W, 1280] channels-last feature map (bf16 recommended;
    the kernel accumulates the pool in f32 either way).
    head_params: output of prepare_head_params()."""
    B, H, W, C = feat_nhwc.shape
    assert C == FEATURE_DIM
    HW = H * W
    x = feat_nhwc.reshape(B, HW, C)            # free reshape — no transpose

    pair_budget = pair_budget_bytes if pair_budget_bytes is not None else _x_pair_budget_bytes()
    bB, tHW = _choose_tiles(B, HW, x.dtype.itemsize, pair_budget)
    grid = (pl.cdiv(B, bB), pl.cdiv(HW, tHW))

    kernel = functools.partial(_head_kernel, hw=HW, inv_hw=1.0 / HW)

    x_pair_bytes = 2 * bB * tHW * FEATURE_DIM * x.dtype.itemsize
    # Headroom for double-buffered bf16 weights (~1 MiB), f32 acc, output, misc.
    vmem_limit = int(min(max(x_pair_bytes + (6 << 20), 16 << 20), 56 << 20))

    w_bytes = sum(int(v.size) * v.dtype.itemsize for v in head_params.values())
    cost = pl.CostEstimate(
        flops=int(B * HW * FEATURE_DIM                          # pool adds
                  + 2 * B * FEATURE_DIM * ADAPTER_DIM           # down-proj
                  + 2 * B * ADAPTER_DIM * LANE_OUT              # folded up->cls
                  + 2 * B * FEATURE_DIM * LANE_OUT),            # residual cls
        transcendentals=0,
        bytes_accessed=int(x.size * x.dtype.itemsize + w_bytes + B * LANE_OUT * 4),
    )

    out = pl.pallas_call(
        kernel,
        out_shape=jax.ShapeDtypeStruct((B, LANE_OUT), jnp.float32),
        grid_spec=pltpu.PrefetchScalarGridSpec(
            num_scalar_prefetch=0,
            grid=grid,
            in_specs=[
                # Feature-map tile: streamed over batch (parallel) and HW (reduce).
                pl.BlockSpec((bB, tHW, FEATURE_DIM), lambda b, k: (b, k, 0)),
                # Small weights/biases: resident, constant index maps.
                pl.BlockSpec((FEATURE_DIM, ADAPTER_DIM), lambda b, k: (0, 0)),
                pl.BlockSpec((1, ADAPTER_DIM), lambda b, k: (0, 0)),
                pl.BlockSpec((ADAPTER_DIM, LANE_OUT), lambda b, k: (0, 0)),
                pl.BlockSpec((FEATURE_DIM, LANE_OUT), lambda b, k: (0, 0)),
                pl.BlockSpec((1, LANE_OUT), lambda b, k: (0, 0)),
            ],
            out_specs=pl.BlockSpec((bB, LANE_OUT), lambda b, k: (b, 0)),
            scratch_shapes=[pltpu.VMEM((bB, FEATURE_DIM), jnp.float32)],
        ),
        compiler_params=pltpu.CompilerParams(
            dimension_semantics=("parallel", "arbitrary"),
            vmem_limit_bytes=vmem_limit,
        ),
        cost_estimate=cost,
    )(x, head_params["wd"], head_params["bd"], head_params["wuc"],
      head_params["wc_pad"], head_params["b_fold"])

    return out[:, :NUM_CLASSES]


def init_params(key):
    """Deterministic parameter init (shapes match the PyTorch module; weights
    stored [in_dim, out_dim], i.e. transposed vs nn.Linear)."""
    ks = jax.random.split(key, 6)

    def linear(kw, kb, in_dim, out_dim):
        bound = 1.0 / jnp.sqrt(in_dim)
        w = jax.random.uniform(kw, (in_dim, out_dim), jnp.float32, -bound, bound)
        b = jax.random.uniform(kb, (1, out_dim), jnp.float32, -bound, bound)
        return w, b

    wd, bd = linear(ks[0], ks[1], FEATURE_DIM, ADAPTER_DIM)   # down_project
    wu, bu = linear(ks[2], ks[3], ADAPTER_DIM, FEATURE_DIM)   # up_project
    wc, bc = linear(ks[4], ks[5], FEATURE_DIM, NUM_CLASSES)   # classifier[1]
    return {"wd": wd, "bd": bd, "wu": wu, "bu": bu, "wc": wc, "bc": bc}


def _reference(feat_nhwc_f32, p):
    """Pure-JAX reference (un-folded, un-padded, f32) matching the PyTorch forward."""
    pooled = jnp.mean(feat_nhwc_f32, axis=(1, 2))                   # pool + flatten
    h = jnp.maximum(pooled @ p["wd"] + p["bd"], 0.0)                # adapter down + ReLU
    y = h @ p["wu"] + p["bu"] + pooled                              # adapter up + residual
    return y @ p["wc"] + p["bc"]                                    # dropout(eval)=id, linear


if __name__ == "__main__":
    key = jax.random.PRNGKey(0)
    k_param, k_x = jax.random.split(key)

    params = init_params(k_param)
    head_params = prepare_head_params(params)   # one-time folding/padding/bf16 cast

    # EfficientNet's final feature map for a 224x224 input: [B, 7, 7, 1280].
    B, H, W = 2, 7, 7
    feat_f32 = jax.random.normal(k_x, (B, H, W, FEATURE_DIM), jnp.float32)
    feat = feat_f32.astype(jnp.bfloat16)   # bf16 channels-last backbone output

    ref = jax.block_until_ready(_reference(feat.astype(jnp.float32), params))

    # 1) Default per-generation tiling (single HW step at this tiny size).
    logits = jax.block_until_ready(efficientnet_adapter_head(feat, head_params))
    assert logits.shape == (B, NUM_CLASSES)
    assert jnp.allclose(logits, ref, atol=1e-2, rtol=1e-2), "mismatch (default tiling)"

    # 2) Tiny forced budget -> multi-step HW grid with a masked tail block
    #    (exercises the cdiv + tail-mask path used for large real feature maps).
    logits_tiled = jax.block_until_ready(
        efficientnet_adapter_head(feat, head_params, pair_budget_bytes=160 * 1024))
    assert logits_tiled.shape == (B, NUM_CLASSES)
    assert jnp.allclose(logits_tiled, ref, atol=1e-2, rtol=1e-2), "mismatch (tiled/masked)"

    print("KERNEL_OK")
</pallas_src>

<mosaic_0001>
module attributes {stable_mosaic.version = 11 : i64} {
  func.func @_head_kernel(%arg0: i32, %arg1: i32, %arg2: memref<2x49x1280xbf16, #tpu.memory_space<vmem>>, %arg3: memref<1280x64xbf16, #tpu.memory_space<vmem>>, %arg4: memref<1x64xf32, #tpu.memory_space<vmem>>, %arg5: memref<64x128xbf16, #tpu.memory_space<vmem>>, %arg6: memref<1280x128xbf16, #tpu.memory_space<vmem>>, %arg7: memref<1x128xf32, #tpu.memory_space<vmem>>, %arg8: memref<2x128xf32, #tpu.memory_space<vmem>>, %arg9: memref<2x1280xf32, #tpu.memory_space<vmem>>) attributes {dimension_semantics = [#tpu.dimension_semantics<parallel>, #tpu.dimension_semantics<arbitrary>], iteration_bounds = array<i64: 1, 1>, scalar_prefetch = 0 : i64, scratch_operands = 1 : i64, tpu.core_type = #tpu.core_type<tc>, window_params = [{transform_indices = @transform_0, window_bounds = array<i64: 2, 49, 1280>}, {pipeline_mode = #tpu.pipeline_mode<synchronous>, transform_indices = @transform_1, window_bounds = array<i64: 1280, 64>}, {pipeline_mode = #tpu.pipeline_mode<synchronous>, transform_indices = @transform_2, window_bounds = array<i64: 1, 64>}, {pipeline_mode = #tpu.pipeline_mode<synchronous>, transform_indices = @transform_3, window_bounds = array<i64: 64, 128>}, {pipeline_mode = #tpu.pipeline_mode<synchronous>, transform_indices = @transform_4, window_bounds = array<i64: 1280, 128>}, {pipeline_mode = #tpu.pipeline_mode<synchronous>, transform_indices = @transform_5, window_bounds = array<i64: 1, 128>}, {transform_indices = @transform_6, window_bounds = array<i64: 2, 128>}]} {
    %c0_i32 = arith.constant 0 : i32
    %0 = arith.cmpi eq, %arg1, %c0_i32 : i32
    %1 = arith.extui %0 : i1 to i32
    %c0_i32_0 = arith.constant 0 : i32
    %2 = arith.cmpi ne, %1, %c0_i32_0 : i32
    scf.if %2 {
      %cst_9 = arith.constant 0.000000e+00 : f32
      %12 = vector.broadcast %cst_9 : f32 to vector<2x1280xf32>
      %c0_10 = arith.constant 0 : index
      %c0_11 = arith.constant 0 : index
      %13 = vector.load %arg9[%c0_10, %c0_11] : memref<2x1280xf32, #tpu.memory_space<vmem>>, vector<2x1280xf32>
      tpu.vector_store %arg9[%c0_10, %c0_11], %12 {strides = array<i32>} : memref<2x1280xf32, #tpu.memory_space<vmem>>, vector<2x1280xf32>,
    } else {
    }
    %c0 = arith.constant 0 : index
    %c0_1 = arith.constant 0 : index
    %c0_2 = arith.constant 0 : index
    %3 = vector.load %arg2[%c0, %c0_1, %c0_2] : memref<2x49x1280xbf16, #tpu.memory_space<vmem>>, vector<2x49x1280xbf16>
    %c0_3 = arith.constant 0 : index
    %c0_4 = arith.constant 0 : index
    %4 = vector.load %arg9[%c0_3, %c0_4] : memref<2x1280xf32, #tpu.memory_space<vmem>>, vector<2x1280xf32>
    %5 = arith.extf %3 : vector<2x49x1280xbf16> to vector<2x49x1280xf32>
    %cst = arith.constant dense<0.000000e+00> : vector<2x1280xf32>
    %6 = vector.multi_reduction <add>, %5, %cst [1] : vector<2x49x1280xf32> to vector<2x1280xf32>
    %7 = arith.addf %4, %6 : vector<2x1280xf32>
    %c0_5 = arith.constant 0 : index
    %c0_6 = arith.constant 0 : index
    %8 = vector.load %arg9[%c0_5, %c0_6] : memref<2x1280xf32, #tpu.memory_space<vmem>>, vector<2x1280xf32>
    tpu.vector_store %arg9[%c0_5, %c0_6], %7 {strides = array<i32>} : memref<2x1280xf32, #tpu.memory_space<vmem>>, vector<2x1280xf32>,
    %c0_i32_7 = arith.constant 0 : i32
    %9 = arith.cmpi eq, %arg1, %c0_i32_7 : i32
    %10 = arith.extui %9 : i1 to i32
    %c0_i32_8 = arith.constant 0 : i32
    %11 = arith.cmpi ne, %10, %c0_i32_8 : i32
    scf.if %11 {
      %c0_9 = arith.constant 0 : index
      %c0_10 = arith.constant 0 : index
      %12 = vector.load %arg9[%c0_9, %c0_10] : memref<2x1280xf32, #tpu.memory_space<vmem>>, vector<2x1280xf32>
      %cst_11 = arith.constant 0.0204081628 : f32
      %13 = vector.broadcast %cst_11 : f32 to vector<2x1280xf32>
      %14 = arith.mulf %12, %13 : vector<2x1280xf32>
      %15 = arith.truncf %14 : vector<2x1280xf32> to vector<2x1280xbf16>
      %c0_12 = arith.constant 0 : index
      %c0_13 = arith.constant 0 : index
      %16 = vector.load %arg3[%c0_12, %c0_13] : memref<1280x64xbf16, #tpu.memory_space<vmem>>, vector<1280x64xbf16>
      %cst_14 = arith.constant dense<0.000000e+00> : vector<2x64xf32>
      %17 = tpu.matmul %15, %16, %cst_14 {dimension_numbers = #tpu.dot_dimension_numbers<[1], [0], [0], [1], [0, 0, 1, 1], [], []>} : vector<2x1280xbf16>, vector<1280x64xbf16>, vector<2x64xf32> -> vector<2x64xf32>
      %c0_15 = arith.constant 0 : index
      %c0_16 = arith.constant 0 : index
      %18 = vector.load %arg4[%c0_15, %c0_16] : memref<1x64xf32, #tpu.memory_space<vmem>>, vector<1x64xf32>
      %19 = vector.broadcast %18 : vector<1x64xf32> to vector<2x64xf32>
      %20 = arith.addf %17, %19 : vector<2x64xf32>
      %cst_17 = arith.constant 0.000000e+00 : f32
      %21 = vector.broadcast %cst_17 : f32 to vector<2x64xf32>
      %22 = arith.maximumf %20, %21 : vector<2x64xf32>
      %23 = arith.truncf %22 : vector<2x64xf32> to vector<2x64xbf16>
      %c0_18 = arith.constant 0 : index
      %c0_19 = arith.constant 0 : index
      %24 = vector.load %arg5[%c0_18, %c0_19] : memref<64x128xbf16, #tpu.memory_space<vmem>>, vector<64x128xbf16>
      %cst_20 = arith.constant dense<0.000000e+00> : vector<2x128xf32>
      %25 = tpu.matmul %23, %24, %cst_20 {dimension_numbers = #tpu.dot_dimension_numbers<[1], [0], [0], [1], [0, 0, 1, 1], [], []>} : vector<2x64xbf16>, vector<64x128xbf16>, vector<2x128xf32> -> vector<2x128xf32>
      %c0_21 = arith.constant 0 : index
      %c0_22 = arith.constant 0 : index
      %26 = vector.load %arg6[%c0_21, %c0_22] : memref<1280x128xbf16, #tpu.memory_space<vmem>>, vector<1280x128xbf16>
      %cst_23 = arith.constant dense<0.000000e+00> : vector<2x128xf32>
      %27 = tpu.matmul %15, %26, %cst_23 {dimension_numbers = #tpu.dot_dimension_numbers<[1], [0], [0], [1], [0, 0, 1, 1], [], []>} : vector<2x1280xbf16>, vector<1280x128xbf16>, vector<2x128xf32> -> vector<2x128xf32>
      %28 = arith.addf %25, %27 : vector<2x128xf32>
      %c0_24 = arith.constant 0 : index
      %c0_25 = arith.constant 0 : index
      %29 = vector.load %arg7[%c0_24, %c0_25] : memref<1x128xf32, #tpu.memory_space<vmem>>, vector<1x128xf32>
      %30 = vector.broadcast %29 : vector<1x128xf32> to vector<2x128xf32>
      %31 = arith.addf %28, %30 : vector<2x128xf32>
      %c0_26 = arith.constant 0 : index
      %c0_27 = arith.constant 0 : index
      %32 = vector.load %arg8[%c0_26, %c0_27] : memref<2x128xf32, #tpu.memory_space<vmem>>, vector<2x128xf32>
      tpu.vector_store %arg8[%c0_26, %c0_27], %31 {strides = array<i32>} : memref<2x128xf32, #tpu.memory_space<vmem>>, vector<2x128xf32>,
    } else {
    }
    return
  }
  func.func @transform_0(%arg0: i32, %arg1: i32) -> (i32, i32, i32) {
    %c0_i32 = arith.constant 0 : i32
    %c0_i32_0 = arith.constant 0 : i32
    return %arg0, %arg1, %c0_i32 : i32, i32, i32
  }
  func.func @transform_1(%arg0: i32, %arg1: i32) -> (i32, i32) {
    %c0_i32 = arith.constant 0 : i32
    %c0_i32_0 = arith.constant 0 : i32
    %c0_i32_1 = arith.constant 0 : i32
    return %c0_i32, %c0_i32_0 : i32, i32
  }
  func.func @transform_2(%arg0: i32, %arg1: i32) -> (i32, i32) {
    %c0_i32 = arith.constant 0 : i32
    %c0_i32_0 = arith.constant 0 : i32
    %c0_i32_1 = arith.constant 0 : i32
    return %c0_i32, %c0_i32_0 : i32, i32
  }
  func.func @transform_3(%arg0: i32, %arg1: i32) -> (i32, i32) {
    %c0_i32 = arith.constant 0 : i32
    %c0_i32_0 = arith.constant 0 : i32
    %c0_i32_1 = arith.constant 0 : i32
    return %c0_i32, %c0_i32_0 : i32, i32
  }
  func.func @transform_4(%arg0: i32, %arg1: i32) -> (i32, i32) {
    %c0_i32 = arith.constant 0 : i32
    %c0_i32_0 = arith.constant 0 : i32
    %c0_i32_1 = arith.constant 0 : i32
    return %c0_i32, %c0_i32_0 : i32, i32
  }
  func.func @transform_5(%arg0: i32, %arg1: i32) -> (i32, i32) {
    %c0_i32 = arith.constant 0 : i32
    %c0_i32_0 = arith.constant 0 : i32
    %c0_i32_1 = arith.constant 0 : i32
    return %c0_i32, %c0_i32_0 : i32, i32
  }
  func.func @transform_6(%arg0: i32, %arg1: i32) -> (i32, i32) {
    %c0_i32 = arith.constant 0 : i32
    %c0_i32_0 = arith.constant 0 : i32
    return %arg0, %c0_i32 : i32, i32
  }
}

</mosaic_0001>

<llo_original>
// kernel: tpu_custom_call.1
$region0: #{tpu_custom_call.1}
  #allocation0 [shape = 'u32[]', space=smem, size = 0x4, offset = 0x4, fixed_abs, tag = 'smem constant byte address 0x4 - core index']
  #allocation1 [shape = 'u32[72,128]{1,0:T(1,128)}', space=vmem, size = 0x9000, scoped, tag = 'internal scratch']
  #allocation2 [shape = 'f32[2,1280]{1,0:T(2,128)}', space=vmem, size = 0x2800, scoped, tag = 'scratch operand']
  %s0 = inlined_call_operand.vmem [shape: bf16[2,49,1280], index: 0, kind: input, shape index: {}]
  %s1 = inlined_call_operand.vmem [shape: bf16[1280,64], index: 1, kind: input, shape index: {}]
  %s2 = inlined_call_operand.vmem [shape: f32[1,64], index: 2, kind: input, shape index: {}]
  %s3 = inlined_call_operand.vmem [shape: bf16[64,128], index: 3, kind: input, shape index: {}]
  %s4 = inlined_call_operand.vmem [shape: bf16[1280,128], index: 4, kind: input, shape index: {}]
  %s5 = inlined_call_operand.vmem [shape: f32[1,128], index: 5, kind: input, shape index: {}]
  %s6 = inlined_call_operand.hbm [shape: f32[2,128], index: 6, kind: output, shape index: {}]
  %s7 = sld [smem:[#allocation0]]
  $region42: #{tpu_custom_call.1} parent=0
    _
  %s9 = ssub.s32 1, %s7
  %s10 = scalar_select 0, %s9, %s7
  $region1: #{tpu_custom_call.1} parent=0
    #allocation3 [shape = 'u8[1024]{0}', space=vmem, size = 0x400, scoped, tag = 'output window, operand 0, single buffered']
    #allocation4 [shape = 's32[1]{0}', space=sflag, size = 0x4, scoped, tag = 'scoped memory for tpu_custom_call.1']
    %11 = vsyncpa [#allocation4], 0
    // Predicated region
    $region2: #{tpu_custom_call.1} parent=1 // pred_check
      _
    $region3: #{tpu_custom_call.1} parent=1 // pred_check_branch
      %13 = sbr.rel (0) target = $region5
    $region4: #{tpu_custom_call.1} parent=1 // pred_region
      _
    $region5: #{tpu_custom_call.1} parent=1 // pred_fallthru
      _
    // Predicated region
    $region6: #{tpu_custom_call.1} parent=1 // pred_check
      _
    $region7: #{tpu_custom_call.1} parent=1 // pred_check_branch
      %15 = sbr.rel (0) target = $region9
    $region8: #{tpu_custom_call.1} parent=1 // pred_region
      _
    $region9: #{tpu_custom_call.1} parent=1 // pred_fallthru
      _
    // Predicated region
    $region10: #{tpu_custom_call.1} parent=1 // pred_check
      _
    $region11: #{tpu_custom_call.1} parent=1 // pred_check_branch
      %17 = sbr.rel (0) target = $region13
    $region12: #{tpu_custom_call.1} parent=1 // pred_region
      _
    $region13: #{tpu_custom_call.1} parent=1 // pred_fallthru
      _
    // Predicated region
    $region14: #{tpu_custom_call.1} parent=1 // pred_check
      _
    $region15: #{tpu_custom_call.1} parent=1 // pred_check_branch
      %19 = sbr.rel (0) target = $region17
    $region16: #{tpu_custom_call.1} parent=1 // pred_region
      _
    $region17: #{tpu_custom_call.1} parent=1 // pred_fallthru
      _
    // Predicated region
    $region18: #{tpu_custom_call.1} parent=1 // pred_check
      _
    $region19: #{tpu_custom_call.1} parent=1 // pred_check_branch
      %21 = sbr.rel (0) target = $region21
    $region20: #{tpu_custom_call.1} parent=1 // pred_region
      _
    $region21: #{tpu_custom_call.1} parent=1 // pred_fallthru
      _
    // Predicated region
    $region22: #{tpu_custom_call.1} parent=1 // pred_check
      _
    $region23: #{tpu_custom_call.1} parent=1 // pred_check_branch
      %23 = sbr.rel (0) target = $region25
    $region24: #{tpu_custom_call.1} parent=1 // pred_region
      _
    $region25: #{tpu_custom_call.1} parent=1 // pred_fallthru
      _
    %p25 = scmp.eq.s32.totalorder 0, 0
    // Predicated region
    $region26: #{tpu_custom_call.1} parent=1 // pred_check
      %p26 = pneg %p25
    $region27: #{tpu_custom_call.1} parent=1 // pred_check_branch
      %28 = sbr.rel (%p26) target = $region29
    $region28: #{tpu_custom_call.1} parent=1 // pred_region
      %29 = vst [vmem:[#allocation2] sm:$0xff] 0.0
      %30 = vst [vmem:[#allocation2 + $0x8] sm:$0xff] 0.0
      %31 = vst [vmem:[#allocation2 + $0x10] sm:$0xf] 0.0
    $region29: #{tpu_custom_call.1} parent=1 // pred_fallthru
      _
    %v32 = vld [vmem:[%s0] sm:$0xff]
    %v33 = vld [vmem:[%s0 + $0x8] sm:$0xff]
    %v34 = vld [vmem:[%s0 + $0x10] sm:$0xff]
    %v35 = vld [vmem:[%s0 + $0x18] sm:$0xff]
    %v36 = vld [vmem:[%s0 + $0x20] sm:$0xff]
    %v37 = vld [vmem:[%s0 + $0x28] sm:$0xff]
    %v38 = vld [vmem:[%s0 + $0x30] sm:$0xff]
    %v39 = vld [vmem:[%s0 + $0x38] sm:$0xff]
    %v40 = vld [vmem:[%s0 + $0x40] sm:$0xff]
    %v41 = vld [vmem:[%s0 + $0x48] sm:$0xff]
    %v42 = vld [vmem:[%s0 + $0x50] sm:$0xff]
    %v43 = vld [vmem:[%s0 + $0x58] sm:$0xff]
    %v44 = vld [vmem:[%s0 + $0x60] sm:$0xff]
    %v45 = vld [vmem:[%s0 + $0x68] sm:$0xff]
    %v46 = vld [vmem:[%s0 + $0x70] sm:$0xff]
    %v47 = vld [vmem:[%s0 + $0x78] sm:$0xff]
    %v48 = vld [vmem:[%s0 + $0x80] sm:$0xff]
    %v49 = vld [vmem:[%s0 + $0x88] sm:$0xff]
    %v50 = vld [vmem:[%s0 + $0x90] sm:$0xff]
    %v51 = vld [vmem:[%s0 + $0x98] sm:$0xff]
    %v52 = vld [vmem:[%s0 + $0xa0] sm:$0xff]
    %v53 = vld [vmem:[%s0 + $0xa8] sm:$0xff]
    %v54 = vld [vmem:[%s0 + $0xb0] sm:$0xff]
    %v55 = vld [vmem:[%s0 + $0xb8] sm:$0xff]
    %v56 = vld [vmem:[%s0 + $0xc0] sm:$0xff]
    %v57 = vld [vmem:[%s0 + $0xc8] sm:$0xff]
    %v58 = vld [vmem:[%s0 + $0xd0] sm:$0xff]
    %v59 = vld [vmem:[%s0 + $0xd8] sm:$0xff]
    %v60 = vld [vmem:[%s0 + $0xe0] sm:$0xff]
    %v61 = vld [vmem:[%s0 + $0xe8] sm:$0xff]
    %v62 = vld [vmem:[%s0 + $0xf0] sm:$0x11]
    %v63 = vld [vmem:[%s0 + $0xf8] sm:$0x11]
    %v64 = vld [vmem:[%s0 + $0x100] sm:$0x11]
    %v65 = vld [vmem:[%s0 + $0x108] sm:$0x11]
    %v66 = vld [vmem:[%s0 + $0x110] sm:$0x11]
    %v67 = vld [vmem:[%s0 + $0x118] sm:$0xff]
    %v68 = vld [vmem:[%s0 + $0x120] sm:$0xff]
    %v69 = vld [vmem:[%s0 + $0x128] sm:$0xff]
    %v70 = vld [vmem:[%s0 + $0x130] sm:$0xff]
    %v71 = vld [vmem:[%s0 + $0x138] sm:$0xff]
    %v72 = vld [vmem:[%s0 + $0x140] sm:$0xff]
    %v73 = vld [vmem:[%s0 + $0x148] sm:$0xff]
    %v74 = vld [vmem:[%s0 + $0x150] sm:$0xff]
    %v75 = vld [vmem:[%s0 + $0x158] sm:$0xff]
    %v76 = vld [vmem:[%s0 + $0x160] sm:$0xff]
    %v77 = vld [vmem:[%s0 + $0x168] sm:$0xff]
    %v78 = vld [vmem:[%s0 + $0x170] sm:$0xff]
    %v79 = vld [vmem:[%s0 + $0x178] sm:$0xff]
    %v80 = vld [vmem:[%s0 + $0x180] sm:$0xff]
    %v81 = vld [vmem:[%s0 + $0x188] sm:$0xff]
    %v82 = vld [vmem:[%s0 + $0x190] sm:$0xff]
    %v83 = vld [vmem:[%s0 + $0x198] sm:$0xff]
    %v84 = vld [vmem:[%s0 + $0x1a0] sm:$0xff]
    %v85 = vld [vmem:[%s0 + $0x1a8] sm:$0xff]
    %v86 = vld [vmem:[%s0 + $0x1b0] sm:$0xff]
    %v87 = vld [vmem:[%s0 + $0x1b8] sm:$0xff]
    %v88 = vld [vmem:[%s0 + $0x1c0] sm:$0xff]
    %v89 = vld [vmem:[%s0 + $0x1c8] sm:$0xff]
    %v90 = vld [vmem:[%s0 + $0x1d0] sm:$0xff]
    %v91 = vld [vmem:[%s0 + $0x1d8] sm:$0xff]
    %v92 = vld [vmem:[%s0 + $0x1e0] sm:$0xff]
    %v93 = vld [vmem:[%s0 + $0x1e8] sm:$0xff]
    %v94 = vld [vmem:[%s0 + $0x1f0] sm:$0xff]
    %v95 = vld [vmem:[%s0 + $0x1f8] sm:$0xff]
    %v96 = vld [vmem:[%s0 + $0x200] sm:$0xff]
    %v97 = vld [vmem:[%s0 + $0x208] sm:$0x11]
    %v98 = vld [vmem:[%s0 + $0x210] sm:$0x11]
    %v99 = vld [vmem:[%s0 + $0x218] sm:$0x11]
    %v100 = vld [vmem:[%s0 + $0x220] sm:$0x11]
    %v101 = vld [vmem:[%s0 + $0x228] sm:$0x11]
    %v102 = vld [vmem:[#allocation2] sm:$0xff]
    %v103 = vld [vmem:[#allocation2 + $0x8] sm:$0xff]
    %v104 = vld [vmem:[#allocation2 + $0x10] sm:$0xf]
    %v105 = vunpack.c.l.bf16 %v32
    %v106 = vunpack.c.h.bf16 %v32
    %v107 = vunpack.c.l.bf16 %v33
    %v108 = vunpack.c.h.bf16 %v33
    %v109 = vunpack.c.l.bf16 %v34
    %v110 = vunpack.c.h.bf16 %v34
    %v111 = vunpack.c.l.bf16 %v35
    %v112 = vunpack.c.h.bf16 %v35
    %v113 = vunpack.c.l.bf16 %v36
    %v114 = vunpack.c.h.bf16 %v36
    %v115 = vunpack.c.l.bf16 %v37
    %v116 = vunpack.c.h.bf16 %v37
    %v117 = vunpack.c.l.bf16 %v38
    %v118 = vunpack.c.h.bf16 %v38
    %v119 = vunpack.c.l.bf16 %v39
    %v120 = vunpack.c.h.bf16 %v39
    %v121 = vunpack.c.l.bf16 %v40
    %v122 = vunpack.c.h.bf16 %v40
    %v123 = vunpack.c.l.bf16 %v41
    %v124 = vunpack.c.h.bf16 %v41
    %v125 = vunpack.c.l.bf16 %v42
    %v126 = vunpack.c.h.bf16 %v42
    %v127 = vunpack.c.l.bf16 %v43
    %v128 = vunpack.c.h.bf16 %v43
    %v129 = vunpack.c.l.bf16 %v44
    %v130 = vunpack.c.h.bf16 %v44
    %v131 = vunpack.c.l.bf16 %v45
    %v132 = vunpack.c.h.bf16 %v45
    %v133 = vunpack.c.l.bf16 %v46
    %v134 = vunpack.c.h.bf16 %v46
    %v135 = vunpack.c.l.bf16 %v47
    %v136 = vunpack.c.h.bf16 %v47
    %v137 = vunpack.c.l.bf16 %v48
    %v138 = vunpack.c.h.bf16 %v48
    %v139 = vunpack.c.l.bf16 %v49
    %v140 = vunpack.c.h.bf16 %v49
    %v141 = vunpack.c.l.bf16 %v50
    %v142 = vunpack.c.h.bf16 %v50
    %v143 = vunpack.c.l.bf16 %v51
    %v144 = vunpack.c.h.bf16 %v51
    %v145 = vunpack.c.l.bf16 %v52
    %v146 = vunpack.c.h.bf16 %v52
    %v147 = vunpack.c.l.bf16 %v53
    %v148 = vunpack.c.h.bf16 %v53
    %v149 = vunpack.c.l.bf16 %v54
    %v150 = vunpack.c.h.bf16 %v54
    %v151 = vunpack.c.l.bf16 %v55
    %v152 = vunpack.c.h.bf16 %v55
    %v153 = vunpack.c.l.bf16 %v56
    %v154 = vunpack.c.h.bf16 %v56
    %v155 = vunpack.c.l.bf16 %v57
    %v156 = vunpack.c.h.bf16 %v57
    %v157 = vunpack.c.l.bf16 %v58
    %v158 = vunpack.c.h.bf16 %v58
    %v159 = vunpack.c.l.bf16 %v59
    %v160 = vunpack.c.h.bf16 %v59
    %v161 = vunpack.c.l.bf16 %v60
    %v162 = vunpack.c.h.bf16 %v60
    %v163 = vunpack.c.l.bf16 %v61
    %v164 = vunpack.c.h.bf16 %v61
    %v165 = vunpack.c.l.bf16 %v62
    %v166 = vunpack.c.h.bf16 %v62
    %v167 = vunpack.c.l.bf16 %v63
    %v168 = vunpack.c.h.bf16 %v63
    %v169 = vunpack.c.l.bf16 %v64
    %v170 = vunpack.c.h.bf16 %v64
    %v171 = vunpack.c.l.bf16 %v65
    %v172 = vunpack.c.h.bf16 %v65
    %v173 = vunpack.c.l.bf16 %v66
    %v174 = vunpack.c.h.bf16 %v66
    %v175 = vunpack.c.l.bf16 %v67
    %v176 = vunpack.c.h.bf16 %v67
    %v177 = vunpack.c.l.bf16 %v68
    %v178 = vunpack.c.h.bf16 %v68
    %v179 = vunpack.c.l.bf16 %v69
    %v180 = vunpack.c.h.bf16 %v69
    %v181 = vunpack.c.l.bf16 %v70
    %v182 = vunpack.c.h.bf16 %v70
    %v183 = vunpack.c.l.bf16 %v71
    %v184 = vunpack.c.h.bf16 %v71
    %v185 = vunpack.c.l.bf16 %v72
    %v186 = vunpack.c.h.bf16 %v72
    %v187 = vunpack.c.l.bf16 %v73
    %v188 = vunpack.c.h.bf16 %v73
    %v189 = vunpack.c.l.bf16 %v74
    %v190 = vunpack.c.h.bf16 %v74
    %v191 = vunpack.c.l.bf16 %v75
    %v192 = vunpack.c.h.bf16 %v75
    %v193 = vunpack.c.l.bf16 %v76
    %v194 = vunpack.c.h.bf16 %v76
    %v195 = vunpack.c.l.bf16 %v77
    %v196 = vunpack.c.h.bf16 %v77
    %v197 = vunpack.c.l.bf16 %v78
    %v198 = vunpack.c.h.bf16 %v78
    %v199 = vunpack.c.l.bf16 %v79
    %v200 = vunpack.c.h.bf16 %v79
    %v201 = vunpack.c.l.bf16 %v80
    %v202 = vunpack.c.h.bf16 %v80
    %v203 = vunpack.c.l.bf16 %v81
    %v204 = vunpack.c.h.bf16 %v81
    %v205 = vunpack.c.l.bf16 %v82
    %v206 = vunpack.c.h.bf16 %v82
    %v207 = vunpack.c.l.bf16 %v83
    %v208 = vunpack.c.h.bf16 %v83
    %v209 = vunpack.c.l.bf16 %v84
    %v210 = vunpack.c.h.bf16 %v84
    %v211 = vunpack.c.l.bf16 %v85
    %v212 = vunpack.c.h.bf16 %v85
    %v213 = vunpack.c.l.bf16 %v86
    %v214 = vunpack.c.h.bf16 %v86
    %v215 = vunpack.c.l.bf16 %v87
    %v216 = vunpack.c.h.bf16 %v87
    %v217 = vunpack.c.l.bf16 %v88
    %v218 = vunpack.c.h.bf16 %v88
    %v219 = vunpack.c.l.bf16 %v89
    %v220 = vunpack.c.h.bf16 %v89
    %v221 = vunpack.c.l.bf16 %v90
    %v222 = vunpack.c.h.bf16 %v90
    %v223 = vunpack.c.l.bf16 %v91
    %v224 = vunpack.c.h.bf16 %v91
    %v225 = vunpack.c.l.bf16 %v92
    %v226 = vunpack.c.h.bf16 %v92
    %v227 = vunpack.c.l.bf16 %v93
    %v228 = vunpack.c.h.bf16 %v93
    %v229 = vunpack.c.l.bf16 %v94
    %v230 = vunpack.c.h.bf16 %v94
    %v231 = vunpack.c.l.bf16 %v95
    %v232 = vunpack.c.h.bf16 %v95
    %v233 = vunpack.c.l.bf16 %v96
    %v234 = vunpack.c.h.bf16 %v96
    %v235 = vunpack.c.l.bf16 %v97
    %v236 = vunpack.c.h.bf16 %v97
    %v237 = vunpack.c.l.bf16 %v98
    %v238 = vunpack.c.h.bf16 %v98
    %v239 = vunpack.c.l.bf16 %v99
    %v240 = vunpack.c.h.bf16 %v99
    %v241 = vunpack.c.l.bf16 %v100
    %v242 = vunpack.c.h.bf16 %v100
    %v243 = vunpack.c.l.bf16 %v101
    %v244 = vunpack.c.h.bf16 %v101
    %v245 = vadd.f32 %v105, %v115
    %v246 = vadd.f32 %v245, %v125
    %v247 = vadd.f32 %v246, %v135
    %v248 = vadd.f32 %v247, %v145
    %v249 = vadd.f32 %v248, %v155
    %vm250 = vcmask 1040384
    %v251 = vsel %vm250, %v165, 0.0
    %v252 = vadd.f32 %v249, %v251
    %v253 = vrot.slane %v252, 4
    %v254 = vadd.f32 %v252, %v253
    %v255 = vrot.slane %v254, 2
    %v256 = vadd.f32 %v254, %v255
    %v257 = vrot.slane %v256, 1
    %v258 = vadd.f32 %v256, %v257
    %v259 = vadd.f32 %v106, %v116
    %v260 = vadd.f32 %v259, %v126
    %v261 = vadd.f32 %v260, %v136
    %v262 = vadd.f32 %v261, %v146
    %v263 = vadd.f32 %v262, %v156
    %v264 = vsel %vm250, %v166, 0.0
    %v265 = vadd.f32 %v263, %v264
    %v266 = vrot.slane %v265, 4
    %v267 = vadd.f32 %v265, %v266
    %v268 = vrot.slane %v267, 2
    %v269 = vadd.f32 %v267, %v268
    %v270 = vrot.slane %v269, 1
    %v271 = vadd.f32 %v269, %v270
    %v272 = vadd.f32 %v107, %v117
    %v273 = vadd.f32 %v272, %v127
    %v274 = vadd.f32 %v273, %v137
    %v275 = vadd.f32 %v274, %v147
    %v276 = vadd.f32 %v275, %v157
    %v277 = vsel %vm250, %v167, 0.0
    %v278 = vadd.f32 %v276, %v277
    %v279 = vrot.slane %v278, 4
    %v280 = vadd.f32 %v278, %v279
    %v281 = vrot.slane %v280, 2
    %v282 = vadd.f32 %v280, %v281
    %v283 = vrot.slane %v282, 1
    %v284 = vadd.f32 %v282, %v283
    %v285 = vadd.f32 %v108, %v118
    %v286 = vadd.f32 %v285, %v128
    %v287 = vadd.f32 %v286, %v138
    %v288 = vadd.f32 %v287, %v148
    %v289 = vadd.f32 %v288, %v158
    %v290 = vsel %vm250, %v168, 0.0
    %v291 = vadd.f32 %v289, %v290
    %v292 = vrot.slane %v291, 4
    %v293 = vadd.f32 %v291, %v292
    %v294 = vrot.slane %v293, 2
    %v295 = vadd.f32 %v293, %v294
    %v296 = vrot.slane %v295, 1
    %v297 = vadd.f32 %v295, %v296
    %v298 = vadd.f32 %v109, %v119
    %v299 = vadd.f32 %v298, %v129
    %v300 = vadd.f32 %v299, %v139
    %v301 = vadd.f32 %v300, %v149
    %v302 = vadd.f32 %v301, %v159
    %v303 = vsel %vm250, %v169, 0.0
    %v304 = vadd.f32 %v302, %v303
    %v305 = vrot.slane %v304, 4
    %v306 = vadd.f32 %v304, %v305
    %v307 = vrot.slane %v306, 2
    %v308 = vadd.f32 %v306, %v307
    %v309 = vrot.slane %v308, 1
    %v310 = vadd.f32 %v308, %v309
    %v311 = vadd.f32 %v110, %v120
    %v312 = vadd.f32 %v311, %v130
    %v313 = vadd.f32 %v312, %v140
    %v314 = vadd.f32 %v313, %v150
    %v315 = vadd.f32 %v314, %v160
    %v316 = vsel %vm250, %v170, 0.0
    %v317 = vadd.f32 %v315, %v316
    %v318 = vrot.slane %v317, 4
    %v319 = vadd.f32 %v317, %v318
    %v320 = vrot.slane %v319, 2
    %v321 = vadd.f32 %v319, %v320
    %v322 = vrot.slane %v321, 1
    %v323 = vadd.f32 %v321, %v322
    %v324 = vadd.f32 %v111, %v121
    %v325 = vadd.f32 %v324, %v131
    %v326 = vadd.f32 %v325, %v141
    %v327 = vadd.f32 %v326, %v151
    %v328 = vadd.f32 %v327, %v161
    %v329 = vsel %vm250, %v171, 0.0
    %v330 = vadd.f32 %v328, %v329
    %v331 = vrot.slane %v330, 4
    %v332 = vadd.f32 %v330, %v331
    %v333 = vrot.slane %v332, 2
    %v334 = vadd.f32 %v332, %v333
    %v335 = vrot.slane %v334, 1
    %v336 = vadd.f32 %v334, %v335
    %v337 = vadd.f32 %v112, %v122
    %v338 = vadd.f32 %v337, %v132
    %v339 = vadd.f32 %v338, %v142
    %v340 = vadd.f32 %v339, %v152
    %v341 = vadd.f32 %v340, %v162
    %v342 = vsel %vm250, %v172, 0.0
    %v343 = vadd.f32 %v341, %v342
    %v344 = vrot.slane %v343, 4
    %v345 = vadd.f32 %v343, %v344
    %v346 = vrot.slane %v345, 2
    %v347 = vadd.f32 %v345, %v346
    %v348 = vrot.slane %v347, 1
    %v349 = vadd.f32 %v347, %v348
    %v350 = vadd.f32 %v113, %v123
    %v351 = vadd.f32 %v350, %v133
    %v352 = vadd.f32 %v351, %v143
    %v353 = vadd.f32 %v352, %v153
    %v354 = vadd.f32 %v353, %v163
    %v355 = vsel %vm250, %v173, 0.0
    %v356 = vadd.f32 %v354, %v355
    %v357 = vrot.slane %v356, 4
    %v358 = vadd.f32 %v356, %v357
    %v359 = vrot.slane %v358, 2
    %v360 = vadd.f32 %v358, %v359
    %v361 = vrot.slane %v360, 1
    %v362 = vadd.f32 %v360, %v361
    %v363 = vadd.f32 %v114, %v124
    %v364 = vadd.f32 %v363, %v134
    %v365 = vadd.f32 %v364, %v144
    %v366 = vadd.f32 %v365, %v154
    %v367 = vadd.f32 %v366, %v164
    %v368 = vsel %vm250, %v174, 0.0
    %v369 = vadd.f32 %v367, %v368
    %v370 = vrot.slane %v369, 4
    %v371 = vadd.f32 %v369, %v370
    %v372 = vrot.slane %v371, 2
    %v373 = vadd.f32 %v371, %v372
    %v374 = vrot.slane %v373, 1
    %v375 = vadd.f32 %v373, %v374
    %v376 = vadd.f32 %v175, %v185
    %v377 = vadd.f32 %v376, %v195
    %v378 = vadd.f32 %v377, %v205
    %v379 = vadd.f32 %v378, %v215
    %v380 = vadd.f32 %v379, %v225
    %v381 = vsel %vm250, %v235, 0.0
    %v382 = vadd.f32 %v380, %v381
    %v383 = vrot.slane %v382, 4
    %v384 = vadd.f32 %v382, %v383
    %v385 = vrot.slane %v384, 2
    %v386 = vadd.f32 %v384, %v385
    %v387 = vrot.slane %v386, 1
    %v388 = vadd.f32 %v386, %v387
    %v389 = vadd.f32 %v176, %v186
    %v390 = vadd.f32 %v389, %v196
    %v391 = vadd.f32 %v390, %v206
    %v392 = vadd.f32 %v391, %v216
    %v393 = vadd.f32 %v392, %v226
    %v394 = vsel %vm250, %v236, 0.0
    %v395 = vadd.f32 %v393, %v394
    %v396 = vrot.slane %v395, 4
    %v397 = vadd.f32 %v395, %v396
    %v398 = vrot.slane %v397, 2
    %v399 = vadd.f32 %v397, %v398
    %v400 = vrot.slane %v399, 1
    %v401 = vadd.f32 %v399, %v400
    %v402 = vadd.f32 %v177, %v187
    %v403 = vadd.f32 %v402, %v197
    %v404 = vadd.f32 %v403, %v207
    %v405 = vadd.f32 %v404, %v217
    %v406 = vadd.f32 %v405, %v227
    %v407 = vsel %vm250, %v237, 0.0
    %v408 = vadd.f32 %v406, %v407
    %v409 = vrot.slane %v408, 4
    %v410 = vadd.f32 %v408, %v409
    %v411 = vrot.slane %v410, 2
    %v412 = vadd.f32 %v410, %v411
    %v413 = vrot.slane %v412, 1
    %v414 = vadd.f32 %v412, %v413
    %v415 = vadd.f32 %v178, %v188
    %v416 = vadd.f32 %v415, %v198
    %v417 = vadd.f32 %v416, %v208
    %v418 = vadd.f32 %v417, %v218
    %v419 = vadd.f32 %v418, %v228
    %v420 = vsel %vm250, %v238, 0.0
    %v421 = vadd.f32 %v419, %v420
    %v422 = vrot.slane %v421, 4
    %v423 = vadd.f32 %v421, %v422
    %v424 = vrot.slane %v423, 2
    %v425 = vadd.f32 %v423, %v424
    %v426 = vrot.slane %v425, 1
    %v427 = vadd.f32 %v425, %v426
    %v428 = vadd.f32 %v179, %v189
    %v429 = vadd.f32 %v428, %v199
    %v430 = vadd.f32 %v429, %v209
    %v431 = vadd.f32 %v430, %v219
    %v432 = vadd.f32 %v431, %v229
    %v433 = vsel %vm250, %v239, 0.0
    %v434 = vadd.f32 %v432, %v433
    %v435 = vrot.slane %v434, 4
    %v436 = vadd.f32 %v434, %v435
    %v437 = vrot.slane %v436, 2
    %v438 = vadd.f32 %v436, %v437
    %v439 = vrot.slane %v438, 1
    %v440 = vadd.f32 %v438, %v439
    %v441 = vadd.f32 %v180, %v190
    %v442 = vadd.f32 %v441, %v200
    %v443 = vadd.f32 %v442, %v210
    %v444 = vadd.f32 %v443, %v220
    %v445 = vadd.f32 %v444, %v230
    %v446 = vsel %vm250, %v240, 0.0
    %v447 = vadd.f32 %v445, %v446
    %v448 = vrot.slane %v447, 4
    %v449 = vadd.f32 %v447, %v448
    %v450 = vrot.slane %v449, 2
    %v451 = vadd.f32 %v449, %v450
    %v452 = vrot.slane %v451, 1
    %v453 = vadd.f32 %v451, %v452
    %v454 = vadd.f32 %v181, %v191
    %v455 = vadd.f32 %v454, %v201
    %v456 = vadd.f32 %v455, %v211
    %v457 = vadd.f32 %v456, %v221
    %v458 = vadd.f32 %v457, %v231
    %v459 = vsel %vm250, %v241, 0.0
    %v460 = vadd.f32 %v458, %v459
    %v461 = vrot.slane %v460, 4
    %v462 = vadd.f32 %v460, %v461
    %v463 = vrot.slane %v462, 2
    %v464 = vadd.f32 %v462, %v463
    %v465 = vrot.slane %v464, 1
    %v466 = vadd.f32 %v464, %v465
    %v467 = vadd.f32 %v182, %v192
    %v468 = vadd.f32 %v467, %v202
    %v469 = vadd.f32 %v468, %v212
    %v470 = vadd.f32 %v469, %v222
    %v471 = vadd.f32 %v470, %v232
    %v472 = vsel %vm250, %v242, 0.0
    %v473 = vadd.f32 %v471, %v472
    %v474 = vrot.slane %v473, 4
    %v475 = vadd.f32 %v473, %v474
    %v476 = vrot.slane %v475, 2
    %v477 = vadd.f32 %v475, %v476
    %v478 = vrot.slane %v477, 1
    %v479 = vadd.f32 %v477, %v478
    %v480 = vadd.f32 %v183, %v193
    %v481 = vadd.f32 %v480, %v203
    %v482 = vadd.f32 %v481, %v213
    %v483 = vadd.f32 %v482, %v223
    %v484 = vadd.f32 %v483, %v233
    %v485 = vsel %vm250, %v243, 0.0
    %v486 = vadd.f32 %v484, %v485
    %v487 = vrot.slane %v486, 4
    %v488 = vadd.f32 %v486, %v487
    %v489 = vrot.slane %v488, 2
    %v490 = vadd.f32 %v488, %v489
    %v491 = vrot.slane %v490, 1
    %v492 = vadd.f32 %v490, %v491
    %v493 = vadd.f32 %v184, %v194
    %v494 = vadd.f32 %v493, %v204
    %v495 = vadd.f32 %v494, %v214
    %v496 = vadd.f32 %v495, %v224
    %v497 = vadd.f32 %v496, %v234
    %v498 = vsel %vm250, %v244, 0.0
    %v499 = vadd.f32 %v497, %v498
    %v500 = vrot.slane %v499, 4
    %v501 = vadd.f32 %v499, %v500
    %v502 = vrot.slane %v501, 2
    %v503 = vadd.f32 %v501, %v502
    %v504 = vrot.slane %v503, 1
    %v505 = vadd.f32 %v503, %v504
    %v526 = vrot.slane %v271, 6
    %v527 = vrot.slane %v284, 4
    %v528 = vrot.slane %v297, 2
    %v529 = vrot.slane %v323, 6
    %v530 = vrot.slane %v336, 4
    %v531 = vrot.slane %v349, 2
    %v532 = vrot.slane %v375, 6
    %v533 = vrot.slane %v401, 6
    %v534 = vrot.slane %v414, 4
    %v535 = vrot.slane %v427, 2
    %v536 = vrot.slane %v453, 6
    %v537 = vrot.slane %v466, 4
    %v538 = vrot.slane %v479, 2
    %v539 = vrot.slane %v505, 6
    %vm540 = vcmask 1041408
    %v541 = vsel %vm540, %v258, %v526
    %vm542 = vcmask 1045508
    %v543 = vsel %vm542, %v527, %v528
    %vm544 = vcmask 1043456
    %v545 = vsel %vm544, %v541, %v543
    %v546 = vsel %vm540, %v310, %v529
    %v547 = vsel %vm542, %v530, %v531
    %v548 = vsel %vm544, %v546, %v547
    %v549 = vsel %vm540, %v362, %v532
    %v550 = vsel %vm540, %v388, %v533
    %v551 = vsel %vm542, %v534, %v535
    %v552 = vsel %vm544, %v550, %v551
    %v553 = vsel %vm540, %v440, %v536
    %v554 = vsel %vm542, %v537, %v538
    %v555 = vsel %vm544, %v553, %v554
    %v556 = vsel %vm540, %v492, %v539
    %vm557 = vcmask 1044484
    %v558 = vsel %vm557, %v545, %v545
    %vm559 = vcmask 1046534
    %v560 = vsel %vm559, %v545, %v558
    %v561 = vrot.slane %v552, 7
    %vm562 = vcmask 1041409
    %v563 = vsel %vm562, %v561, %v560
    %vm564 = vcmask 1043459
    %v565 = vsel %vm564, %v561, %v563
    %vm566 = vcmask 1045509
    %v567 = vsel %vm566, %v561, %v565
    %vm568 = vcmask 1047559
    %v569 = vsel %vm568, %v561, %v567
    %v570 = vsel %vm557, %v548, %v548
    %v571 = vsel %vm559, %v548, %v570
    %v572 = vrot.slane %v555, 7
    %v573 = vsel %vm562, %v572, %v571
    %v574 = vsel %vm564, %v572, %v573
    %v575 = vsel %vm566, %v572, %v574
    %v576 = vsel %vm568, %v572, %v575
    %v577 = vsel %vm557, %v549, %v549
    %v578 = vsel %vm559, %v549, %v577
    %v579 = vrot.slane %v556, 7
    %v580 = vsel %vm562, %v579, %v578
    %v581 = vsel %vm564, %v579, %v580
    %v582 = vsel %vm566, %v579, %v581
    %v583 = vsel %vm568, %v579, %v582
    %v587 = vadd.f32 %v102, %v569
    %v588 = vadd.f32 %v103, %v576
    %v589 = vadd.f32 %v104, %v583
    %590 = vst [vmem:[#allocation2] sm:$0xff] %v587
    %591 = vst [vmem:[#allocation2 + $0x8] sm:$0xff] %v588
    %592 = vst [vmem:[#allocation2 + $0x10] sm:$0xf] %v589
    // Predicated region
    $region30: #{tpu_custom_call.1} parent=1 // pred_check
      %p593 = pneg %p25
    $region31: #{tpu_custom_call.1} parent=1 // pred_check_branch
      %595 = sbr.rel (%p593) target = $region33
    $region32: #{tpu_custom_call.1} parent=1 // pred_region
      %v596 = vld [vmem:[#allocation2] sm:$0xff]
      %v597 = vld [vmem:[#allocation2 + $0x8] sm:$0xff]
      %v598 = vld [vmem:[#allocation2 + $0x10] sm:$0xf]
      %v599 = vmul.f32 %v596, 0.020408163
      %v600 = vmul.f32 %v597, 0.020408163
      %v601 = vmul.f32 %v598, 0.020408163
      %605 = vst [vmem:[#allocation1] ss:$4 sm:$0xff] %v599
      %s606 = scalar_lea.vmem [#allocation1], 32
      %607 = vst [vmem:[%s606] ss:$4 sm:$0xff] %v600
      %v608 = vld.sshfl [vmem:[#allocation1] sm:$0xff pattern:$0x73625140]
      %v609 = vld.sshfl [vmem:[#allocation1 + $0x8] sm:$0xff pattern:$0x73625140]
      %v610 = vld.sshfl [vmem:[#allocation1 + $0x10] sm:$0xff pattern:$0x73625140]
      %v611 = vld.sshfl [vmem:[#allocation1 + $0x18] sm:$0xff pattern:$0x73625140]
      %v612 = vld.sshfl [vmem:[#allocation1 + $0x20] sm:$0xff pattern:$0x73625140]
      %v613 = vld.sshfl [vmem:[#allocation1 + $0x28] sm:$0xff pattern:$0x73625140]
      %v614 = vld.sshfl [vmem:[#allocation1 + $0x30] sm:$0xff pattern:$0x73625140]
      %v615 = vld.sshfl [vmem:[#allocation1 + $0x38] sm:$0xff pattern:$0x73625140]
      %616 = vst [vmem:[#allocation1] ss:$4 sm:$0xff] %v601
      %v617 = vld.sshfl [vmem:[#allocation1] sm:$0xff pattern:$0x73625140]
      %v618 = vld.sshfl [vmem:[#allocation1 + $0x8] sm:$0xff pattern:$0x73625140]
      %v629 = vpack.c.bf16 %v608, %v608
      %v630 = vpack.c.bf16 %v609, %v609
      %v631 = vpack.c.bf16 %v610, %v610
      %v632 = vpack.c.bf16 %v611, %v611
      %v633 = vpack.c.bf16 %v612, %v612
      %v634 = vpack.c.bf16 %v613, %v613
      %v635 = vpack.c.bf16 %v614, %v614
      %v636 = vpack.c.bf16 %v615, %v615
      %v637 = vpack.c.bf16 %v617, %v617
      %v638 = vpack.c.bf16 %v618, %v618
      %v639 = vld [vmem:[%s1] sm:$0xf]
      %v640 = vld [vmem:[%s1 + $0x4] sm:$0xf]
      %v641 = vld [vmem:[%s1 + $0x8] sm:$0xf]
      %v642 = vld [vmem:[%s1 + $0xc] sm:$0xf]
      %v643 = vld [vmem:[%s1 + $0x10] sm:$0xf]
      %v644 = vld [vmem:[%s1 + $0x14] sm:$0xf]
      %v645 = vld [vmem:[%s1 + $0x18] sm:$0xf]
      %v646 = vld [vmem:[%s1 + $0x1c] sm:$0xf]
      %v647 = vld [vmem:[%s1 + $0x20] sm:$0xf]
      %v648 = vld [vmem:[%s1 + $0x24] sm:$0xf]
      %v649 = vld [vmem:[%s1 + $0x28] sm:$0xf]
      %v650 = vld [vmem:[%s1 + $0x2c] sm:$0xf]
      %v651 = vld [vmem:[%s1 + $0x30] sm:$0xf]
      %v652 = vld [vmem:[%s1 + $0x34] sm:$0xf]
      %v653 = vld [vmem:[%s1 + $0x38] sm:$0xf]
      %v654 = vld [vmem:[%s1 + $0x3c] sm:$0xf]
      %v655 = vld [vmem:[%s1 + $0x40] sm:$0xf]
      %v656 = vld [vmem:[%s1 + $0x44] sm:$0xf]
      %v657 = vld [vmem:[%s1 + $0x48] sm:$0xf]
      %v658 = vld [vmem:[%s1 + $0x4c] sm:$0xf]
      %v659 = vld [vmem:[%s1 + $0x50] sm:$0xf]
      %v660 = vld [vmem:[%s1 + $0x54] sm:$0xf]
      %v661 = vld [vmem:[%s1 + $0x58] sm:$0xf]
      %v662 = vld [vmem:[%s1 + $0x5c] sm:$0xf]
      %v663 = vld [vmem:[%s1 + $0x60] sm:$0xf]
      %v664 = vld [vmem:[%s1 + $0x64] sm:$0xf]
      %v665 = vld [vmem:[%s1 + $0x68] sm:$0xf]
      %v666 = vld [vmem:[%s1 + $0x6c] sm:$0xf]
      %v667 = vld [vmem:[%s1 + $0x70] sm:$0xf]
      %v668 = vld [vmem:[%s1 + $0x74] sm:$0xf]
      %v669 = vld [vmem:[%s1 + $0x78] sm:$0xf]
      %v670 = vld [vmem:[%s1 + $0x7c] sm:$0xf]
      %v671 = vld [vmem:[%s1 + $0x80] sm:$0xf]
      %v672 = vld [vmem:[%s1 + $0x84] sm:$0xf]
      %v673 = vld [vmem:[%s1 + $0x88] sm:$0xf]
      %v674 = vld [vmem:[%s1 + $0x8c] sm:$0xf]
      %v675 = vld [vmem:[%s1 + $0x90] sm:$0xf]
      %v676 = vld [vmem:[%s1 + $0x94] sm:$0xf]
      %v677 = vld [vmem:[%s1 + $0x98] sm:$0xf]
      %v678 = vld [vmem:[%s1 + $0x9c] sm:$0xf]
      %v679 = vld [vmem:[%s1 + $0xa0] sm:$0xf]
      %v680 = vld [vmem:[%s1 + $0xa4] sm:$0xf]
      %v681 = vld [vmem:[%s1 + $0xa8] sm:$0xf]
      %v682 = vld [vmem:[%s1 + $0xac] sm:$0xf]
      %v683 = vld [vmem:[%s1 + $0xb0] sm:$0xf]
      %v684 = vld [vmem:[%s1 + $0xb4] sm:$0xf]
      %v685 = vld [vmem:[%s1 + $0xb8] sm:$0xf]
      %v686 = vld [vmem:[%s1 + $0xbc] sm:$0xf]
      %v687 = vld [vmem:[%s1 + $0xc0] sm:$0xf]
      %v688 = vld [vmem:[%s1 + $0xc4] sm:$0xf]
      %v689 = vld [vmem:[%s1 + $0xc8] sm:$0xf]
      %v690 = vld [vmem:[%s1 + $0xcc] sm:$0xf]
      %v691 = vld [vmem:[%s1 + $0xd0] sm:$0xf]
      %v692 = vld [vmem:[%s1 + $0xd4] sm:$0xf]
      %v693 = vld [vmem:[%s1 + $0xd8] sm:$0xf]
      %v694 = vld [vmem:[%s1 + $0xdc] sm:$0xf]
      %v695 = vld [vmem:[%s1 + $0xe0] sm:$0xf]
      %v696 = vld [vmem:[%s1 + $0xe4] sm:$0xf]
      %v697 = vld [vmem:[%s1 + $0xe8] sm:$0xf]
      %v698 = vld [vmem:[%s1 + $0xec] sm:$0xf]
      %v699 = vld [vmem:[%s1 + $0xf0] sm:$0xf]
      %v700 = vld [vmem:[%s1 + $0xf4] sm:$0xf]
      %v701 = vld [vmem:[%s1 + $0xf8] sm:$0xf]
      %v702 = vld [vmem:[%s1 + $0xfc] sm:$0xf]
      %v703 = vld [vmem:[%s1 + $0x100] sm:$0xf]
      %v704 = vld [vmem:[%s1 + $0x104] sm:$0xf]
      %v705 = vld [vmem:[%s1 + $0x108] sm:$0xf]
      %v706 = vld [vmem:[%s1 + $0x10c] sm:$0xf]
      %v707 = vld [vmem:[%s1 + $0x110] sm:$0xf]
      %v708 = vld [vmem:[%s1 + $0x114] sm:$0xf]
      %v709 = vld [vmem:[%s1 + $0x118] sm:$0xf]
      %v710 = vld [vmem:[%s1 + $0x11c] sm:$0xf]
      %v711 = vld [vmem:[%s1 + $0x120] sm:$0xf]
      %v712 = vld [vmem:[%s1 + $0x124] sm:$0xf]
      %v713 = vld [vmem:[%s1 + $0x128] sm:$0xf]
      %v714 = vld [vmem:[%s1 + $0x12c] sm:$0xf]
      %v715 = vld [vmem:[%s1 + $0x130] sm:$0xf]
      %v716 = vld [vmem:[%s1 + $0x134] sm:$0xf]
      %v717 = vld [vmem:[%s1 + $0x138] sm:$0xf]
      %v718 = vld [vmem:[%s1 + $0x13c] sm:$0xf]
      %v719 = vld [vmem:[%s1 + $0x140] sm:$0xf]
      %v720 = vld [vmem:[%s1 + $0x144] sm:$0xf]
      %v721 = vld [vmem:[%s1 + $0x148] sm:$0xf]
      %v722 = vld [vmem:[%s1 + $0x14c] sm:$0xf]
      %v723 = vld [vmem:[%s1 + $0x150] sm:$0xf]
      %v724 = vld [vmem:[%s1 + $0x154] sm:$0xf]
      %v725 = vld [vmem:[%s1 + $0x158] sm:$0xf]
      %v726 = vld [vmem:[%s1 + $0x15c] sm:$0xf]
      %v727 = vld [vmem:[%s1 + $0x160] sm:$0xf]
      %v728 = vld [vmem:[%s1 + $0x164] sm:$0xf]
      %v729 = vld [vmem:[%s1 + $0x168] sm:$0xf]
      %v730 = vld [vmem:[%s1 + $0x16c] sm:$0xf]
      %v731 = vld [vmem:[%s1 + $0x170] sm:$0xf]
      %v732 = vld [vmem:[%s1 + $0x174] sm:$0xf]
      %v733 = vld [vmem:[%s1 + $0x178] sm:$0xf]
      %v734 = vld [vmem:[%s1 + $0x17c] sm:$0xf]
      %v735 = vld [vmem:[%s1 + $0x180] sm:$0xf]
      %v736 = vld [vmem:[%s1 + $0x184] sm:$0xf]
      %v737 = vld [vmem:[%s1 + $0x188] sm:$0xf]
      %v738 = vld [vmem:[%s1 + $0x18c] sm:$0xf]
      %v739 = vld [vmem:[%s1 + $0x190] sm:$0xf]
      %v740 = vld [vmem:[%s1 + $0x194] sm:$0xf]
      %v741 = vld [vmem:[%s1 + $0x198] sm:$0xf]
      %v742 = vld [vmem:[%s1 + $0x19c] sm:$0xf]
      %v743 = vld [vmem:[%s1 + $0x1a0] sm:$0xf]
      %v744 = vld [vmem:[%s1 + $0x1a4] sm:$0xf]
      %v745 = vld [vmem:[%s1 + $0x1a8] sm:$0xf]
      %v746 = vld [vmem:[%s1 + $0x1ac] sm:$0xf]
      %v747 = vld [vmem:[%s1 + $0x1b0] sm:$0xf]
      %v748 = vld [vmem:[%s1 + $0x1b4] sm:$0xf]
      %v749 = vld [vmem:[%s1 + $0x1b8] sm:$0xf]
      %v750 = vld [vmem:[%s1 + $0x1bc] sm:$0xf]
      %v751 = vld [vmem:[%s1 + $0x1c0] sm:$0xf]
      %v752 = vld [vmem:[%s1 + $0x1c4] sm:$0xf]
      %v753 = vld [vmem:[%s1 + $0x1c8] sm:$0xf]
      %v754 = vld [vmem:[%s1 + $0x1cc] sm:$0xf]
      %v755 = vld [vmem:[%s1 + $0x1d0] sm:$0xf]
      %v756 = vld [vmem:[%s1 + $0x1d4] sm:$0xf]
      %v757 = vld [vmem:[%s1 + $0x1d8] sm:$0xf]
      %v758 = vld [vmem:[%s1 + $0x1dc] sm:$0xf]
      %v759 = vld [vmem:[%s1 + $0x1e0] sm:$0xf]
      %v760 = vld [vmem:[%s1 + $0x1e4] sm:$0xf]
      %v761 = vld [vmem:[%s1 + $0x1e8] sm:$0xf]
      %v762 = vld [vmem:[%s1 + $0x1ec] sm:$0xf]
      %v763 = vld [vmem:[%s1 + $0x1f0] sm:$0xf]
      %v764 = vld [vmem:[%s1 + $0x1f4] sm:$0xf]
      %v765 = vld [vmem:[%s1 + $0x1f8] sm:$0xf]
      %v766 = vld [vmem:[%s1 + $0x1fc] sm:$0xf]
      %v767 = vld [vmem:[%s1 + $0x200] sm:$0xf]
      %v768 = vld [vmem:[%s1 + $0x204] sm:$0xf]
      %v769 = vld [vmem:[%s1 + $0x208] sm:$0xf]
      %v770 = vld [vmem:[%s1 + $0x20c] sm:$0xf]
      %v771 = vld [vmem:[%s1 + $0x210] sm:$0xf]
      %v772 = vld [vmem:[%s1 + $0x214] sm:$0xf]
      %v773 = vld [vmem:[%s1 + $0x218] sm:$0xf]
      %v774 = vld [vmem:[%s1 + $0x21c] sm:$0xf]
      %v775 = vld [vmem:[%s1 + $0x220] sm:$0xf]
      %v776 = vld [vmem:[%s1 + $0x224] sm:$0xf]
      %v777 = vld [vmem:[%s1 + $0x228] sm:$0xf]
      %v778 = vld [vmem:[%s1 + $0x22c] sm:$0xf]
      %v779 = vld [vmem:[%s1 + $0x230] sm:$0xf]
      %v780 = vld [vmem:[%s1 + $0x234] sm:$0xf]
      %v781 = vld [vmem:[%s1 + $0x238] sm:$0xf]
      %v782 = vld [vmem:[%s1 + $0x23c] sm:$0xf]
      %v783 = vld [vmem:[%s1 + $0x240] sm:$0xf]
      %v784 = vld [vmem:[%s1 + $0x244] sm:$0xf]
      %v785 = vld [vmem:[%s1 + $0x248] sm:$0xf]
      %v786 = vld [vmem:[%s1 + $0x24c] sm:$0xf]
      %v787 = vld [vmem:[%s1 + $0x250] sm:$0xf]
      %v788 = vld [vmem:[%s1 + $0x254] sm:$0xf]
      %v789 = vld [vmem:[%s1 + $0x258] sm:$0xf]
      %v790 = vld [vmem:[%s1 + $0x25c] sm:$0xf]
      %v791 = vld [vmem:[%s1 + $0x260] sm:$0xf]
      %v792 = vld [vmem:[%s1 + $0x264] sm:$0xf]
      %v793 = vld [vmem:[%s1 + $0x268] sm:$0xf]
      %v794 = vld [vmem:[%s1 + $0x26c] sm:$0xf]
      %v795 = vld [vmem:[%s1 + $0x270] sm:$0xf]
      %v796 = vld [vmem:[%s1 + $0x274] sm:$0xf]
      %v797 = vld [vmem:[%s1 + $0x278] sm:$0xf]
      %v798 = vld [vmem:[%s1 + $0x27c] sm:$0xf]
      %v799 = vld [vmem:[%s2] sm:$0x1]
      %v801 = vperm.slane %v799, 0
      %v963 = vunpack.c.l.b16 %v639
      %v964 = vunpack.c.l.b16 %v640
      %v965 = vunpack.c.l.b16 %v641
      %v966 = vunpack.c.l.b16 %v642
      %v967 = vunpack.c.l.b16 %v643
      %v968 = vunpack.c.l.b16 %v644
      %v969 = vunpack.c.l.b16 %v645
      %v970 = vunpack.c.l.b16 %v646
      %v971 = vunpack.c.l.b16 %v647
      %v972 = vunpack.c.l.b16 %v648
      %v973 = vunpack.c.l.b16 %v649
      %v974 = vunpack.c.l.b16 %v650
      %v975 = vunpack.c.l.b16 %v651
      %v976 = vunpack.c.l.b16 %v652
      %v977 = vunpack.c.l.b16 %v653
      %v978 = vunpack.c.l.b16 %v654
      %v979 = vunpack.c.l.b16 %v655
      %v980 = vunpack.c.l.b16 %v656
      %v981 = vunpack.c.l.b16 %v657
      %v982 = vunpack.c.l.b16 %v658
      %v983 = vunpack.c.l.b16 %v659
      %v984 = vunpack.c.l.b16 %v660
      %v985 = vunpack.c.l.b16 %v661
      %v986 = vunpack.c.l.b16 %v662
      %v987 = vunpack.c.l.b16 %v663
      %v988 = vunpack.c.l.b16 %v664
      %v989 = vunpack.c.l.b16 %v665
      %v990 = vunpack.c.l.b16 %v666
      %v991 = vunpack.c.l.b16 %v667
      %v992 = vunpack.c.l.b16 %v668
      %v993 = vunpack.c.l.b16 %v669
      %v994 = vunpack.c.l.b16 %v670
      %v995 = vunpack.c.l.b16 %v671
      %v996 = vunpack.c.l.b16 %v672
      %v997 = vunpack.c.l.b16 %v673
      %v998 = vunpack.c.l.b16 %v674
      %v999 = vunpack.c.l.b16 %v675
      %v1000 = vunpack.c.l.b16 %v676
      %v1001 = vunpack.c.l.b16 %v677
      %v1002 = vunpack.c.l.b16 %v678
      %v1003 = vunpack.c.l.b16 %v679
      %v1004 = vunpack.c.l.b16 %v680
      %v1005 = vunpack.c.l.b16 %v681
      %v1006 = vunpack.c.l.b16 %v682
      %v1007 = vunpack.c.l.b16 %v683
      %v1008 = vunpack.c.l.b16 %v684
      %v1009 = vunpack.c.l.b16 %v685
      %v1010 = vunpack.c.l.b16 %v686
      %v1011 = vunpack.c.l.b16 %v687
      %v1012 = vunpack.c.l.b16 %v688
      %v1013 = vunpack.c.l.b16 %v689
      %v1014 = vunpack.c.l.b16 %v690
      %v1015 = vunpack.c.l.b16 %v691
      %v1016 = vunpack.c.l.b16 %v692
      %v1017 = vunpack.c.l.b16 %v693
      %v1018 = vunpack.c.l.b16 %v694
      %v1019 = vunpack.c.l.b16 %v695
      %v1020 = vunpack.c.l.b16 %v696
      %v1021 = vunpack.c.l.b16 %v697
      %v1022 = vunpack.c.l.b16 %v698
      %v1023 = vunpack.c.l.b16 %v699
      %v1024 = vunpack.c.l.b16 %v700
      %v1025 = vunpack.c.l.b16 %v701
      %v1026 = vunpack.c.l.b16 %v702
      %v1027 = vunpack.c.l.b16 %v703
      %v1028 = vunpack.c.l.b16 %v704
      %v1029 = vunpack.c.l.b16 %v705
      %v1030 = vunpack.c.l.b16 %v706
      %v1031 = vunpack.c.l.b16 %v707
      %v1032 = vunpack.c.l.b16 %v708
      %v1033 = vunpack.c.l.b16 %v709
      %v1034 = vunpack.c.l.b16 %v710
      %v1035 = vunpack.c.l.b16 %v711
      %v1036 = vunpack.c.l.b16 %v712
      %v1037 = vunpack.c.l.b16 %v713
      %v1038 = vunpack.c.l.b16 %v714
      %v1039 = vunpack.c.l.b16 %v715
      %v1040 = vunpack.c.l.b16 %v716
      %v1041 = vunpack.c.l.b16 %v717
      %v1042 = vunpack.c.l.b16 %v718
      %v1043 = vunpack.c.l.b16 %v719
      %v1044 = vunpack.c.l.b16 %v720
      %v1045 = vunpack.c.l.b16 %v721
      %v1046 = vunpack.c.l.b16 %v722
      %v1047 = vunpack.c.l.b16 %v723
      %v1048 = vunpack.c.l.b16 %v724
      %v1049 = vunpack.c.l.b16 %v725
      %v1050 = vunpack.c.l.b16 %v726
      %v1051 = vunpack.c.l.b16 %v727
      %v1052 = vunpack.c.l.b16 %v728
      %v1053 = vunpack.c.l.b16 %v729
      %v1054 = vunpack.c.l.b16 %v730
      %v1055 = vunpack.c.l.b16 %v731
      %v1056 = vunpack.c.l.b16 %v732
      %v1057 = vunpack.c.l.b16 %v733
      %v1058 = vunpack.c.l.b16 %v734
      %v1059 = vunpack.c.l.b16 %v735
      %v1060 = vunpack.c.l.b16 %v736
      %v1061 = vunpack.c.l.b16 %v737
      %v1062 = vunpack.c.l.b16 %v738
      %v1063 = vunpack.c.l.b16 %v739
      %v1064 = vunpack.c.l.b16 %v740
      %v1065 = vunpack.c.l.b16 %v741
      %v1066 = vunpack.c.l.b16 %v742
      %v1067 = vunpack.c.l.b16 %v743
      %v1068 = vunpack.c.l.b16 %v744
      %v1069 = vunpack.c.l.b16 %v745
      %v1070 = vunpack.c.l.b16 %v746
      %v1071 = vunpack.c.l.b16 %v747
      %v1072 = vunpack.c.l.b16 %v748
      %v1073 = vunpack.c.l.b16 %v749
      %v1074 = vunpack.c.l.b16 %v750
      %v1075 = vunpack.c.l.b16 %v751
      %v1076 = vunpack.c.l.b16 %v752
      %v1077 = vunpack.c.l.b16 %v753
      %v1078 = vunpack.c.l.b16 %v754
      %v1079 = vunpack.c.l.b16 %v755
      %v1080 = vunpack.c.l.b16 %v756
      %v1081 = vunpack.c.l.b16 %v757
      %v1082 = vunpack.c.l.b16 %v758
      %v1083 = vunpack.c.l.b16 %v759
      %v1084 = vunpack.c.l.b16 %v760
      %v1085 = vunpack.c.l.b16 %v761
      %v1086 = vunpack.c.l.b16 %v762
      %v1087 = vunpack.c.l.b16 %v763
      %v1088 = vunpack.c.l.b16 %v764
      %v1089 = vunpack.c.l.b16 %v765
      %v1090 = vunpack.c.l.b16 %v766
      %v1091 = vunpack.c.l.b16 %v767
      %v1092 = vunpack.c.l.b16 %v768
      %v1093 = vunpack.c.l.b16 %v769
      %v1094 = vunpack.c.l.b16 %v770
      %v1095 = vunpack.c.l.b16 %v771
      %v1096 = vunpack.c.l.b16 %v772
      %v1097 = vunpack.c.l.b16 %v773
      %v1098 = vunpack.c.l.b16 %v774
      %v1099 = vunpack.c.l.b16 %v775
      %v1100 = vunpack.c.l.b16 %v776
      %v1101 = vunpack.c.l.b16 %v777
      %v1102 = vunpack.c.l.b16 %v778
      %v1103 = vunpack.c.l.b16 %v779
      %v1104 = vunpack.c.l.b16 %v780
      %v1105 = vunpack.c.l.b16 %v781
      %v1106 = vunpack.c.l.b16 %v782
      %v1107 = vunpack.c.l.b16 %v783
      %v1108 = vunpack.c.l.b16 %v784
      %v1109 = vunpack.c.l.b16 %v785
      %v1110 = vunpack.c.l.b16 %v786
      %v1111 = vunpack.c.l.b16 %v787
      %v1112 = vunpack.c.l.b16 %v788
      %v1113 = vunpack.c.l.b16 %v789
      %v1114 = vunpack.c.l.b16 %v790
      %v1115 = vunpack.c.l.b16 %v791
      %v1116 = vunpack.c.l.b16 %v792
      %v1117 = vunpack.c.l.b16 %v793
      %v1118 = vunpack.c.l.b16 %v794
      %v1119 = vunpack.c.l.b16 %v795
      %v1120 = vunpack.c.l.b16 %v796
      %v1121 = vunpack.c.l.b16 %v797
      %v1122 = vunpack.c.l.b16 %v798
      %v1123 = vpack.c.b16 %v964, %v963
      %v1124 = vpack.c.b16 %v966, %v965
      %v1125 = vpack.c.b16 %v968, %v967
      %v1126 = vpack.c.b16 %v970, %v969
      %v1127 = vpack.c.b16 %v972, %v971
      %v1128 = vpack.c.b16 %v974, %v973
      %v1129 = vpack.c.b16 %v976, %v975
      %v1130 = vpack.c.b16 %v978, %v977
      %v1131 = vpack.c.b16 %v980, %v979
      %v1132 = vpack.c.b16 %v982, %v981
      %v1133 = vpack.c.b16 %v984, %v983
      %v1134 = vpack.c.b16 %v986, %v985
      %v1135 = vpack.c.b16 %v988, %v987
      %v1136 = vpack.c.b16 %v990, %v989
      %v1137 = vpack.c.b16 %v992, %v991
      %v1138 = vpack.c.b16 %v994, %v993
      %v1139 = vpack.c.b16 %v996, %v995
      %v1140 = vpack.c.b16 %v998, %v997
      %v1141 = vpack.c.b16 %v1000, %v999
      %v1142 = vpack.c.b16 %v1002, %v1001
      %v1143 = vpack.c.b16 %v1004, %v1003
      %v1144 = vpack.c.b16 %v1006, %v1005
      %v1145 = vpack.c.b16 %v1008, %v1007
      %v1146 = vpack.c.b16 %v1010, %v1009
      %v1147 = vpack.c.b16 %v1012, %v1011
      %v1148 = vpack.c.b16 %v1014, %v1013
      %v1149 = vpack.c.b16 %v1016, %v1015
      %v1150 = vpack.c.b16 %v1018, %v1017
      %v1151 = vpack.c.b16 %v1020, %v1019
      %v1152 = vpack.c.b16 %v1022, %v1021
      %v1153 = vpack.c.b16 %v1024, %v1023
      %v1154 = vpack.c.b16 %v1026, %v1025
      %v1155 = vpack.c.b16 %v1028, %v1027
      %v1156 = vpack.c.b16 %v1030, %v1029
      %v1157 = vpack.c.b16 %v1032, %v1031
      %v1158 = vpack.c.b16 %v1034, %v1033
      %v1159 = vpack.c.b16 %v1036, %v1035
      %v1160 = vpack.c.b16 %v1038, %v1037
      %v1161 = vpack.c.b16 %v1040, %v1039
      %v1162 = vpack.c.b16 %v1042, %v1041
      %v1163 = vpack.c.b16 %v1044, %v1043
      %v1164 = vpack.c.b16 %v1046, %v1045
      %v1165 = vpack.c.b16 %v1048, %v1047
      %v1166 = vpack.c.b16 %v1050, %v1049
      %v1167 = vpack.c.b16 %v1052, %v1051
      %v1168 = vpack.c.b16 %v1054, %v1053
      %v1169 = vpack.c.b16 %v1056, %v1055
      %v1170 = vpack.c.b16 %v1058, %v1057
      %v1171 = vpack.c.b16 %v1060, %v1059
      %v1172 = vpack.c.b16 %v1062, %v1061
      %v1173 = vpack.c.b16 %v1064, %v1063
      %v1174 = vpack.c.b16 %v1066, %v1065
      %v1175 = vpack.c.b16 %v1068, %v1067
      %v1176 = vpack.c.b16 %v1070, %v1069
      %v1177 = vpack.c.b16 %v1072, %v1071
      %v1178 = vpack.c.b16 %v1074, %v1073
      %v1179 = vpack.c.b16 %v1076, %v1075
      %v1180 = vpack.c.b16 %v1078, %v1077
      %v1181 = vpack.c.b16 %v1080, %v1079
      %v1182 = vpack.c.b16 %v1082, %v1081
      %v1183 = vpack.c.b16 %v1084, %v1083
      %v1184 = vpack.c.b16 %v1086, %v1085
      %v1185 = vpack.c.b16 %v1088, %v1087
      %v1186 = vpack.c.b16 %v1090, %v1089
      %v1187 = vpack.c.b16 %v1092, %v1091
      %v1188 = vpack.c.b16 %v1094, %v1093
      %v1189 = vpack.c.b16 %v1096, %v1095
      %v1190 = vpack.c.b16 %v1098, %v1097
      %v1191 = vpack.c.b16 %v1100, %v1099
      %v1192 = vpack.c.b16 %v1102, %v1101
      %v1193 = vpack.c.b16 %v1104, %v1103
      %v1194 = vpack.c.b16 %v1106, %v1105
      %v1195 = vpack.c.b16 %v1108, %v1107
      %v1196 = vpack.c.b16 %v1110, %v1109
      %v1197 = vpack.c.b16 %v1112, %v1111
      %v1198 = vpack.c.b16 %v1114, %v1113
      %v1199 = vpack.c.b16 %v1116, %v1115
      %v1200 = vpack.c.b16 %v1118, %v1117
      %v1201 = vpack.c.b16 %v1120, %v1119
      %v1202 = vpack.c.b16 %v1122, %v1121
      %1283 = vmatpush.bf16.msra.mxu0 %v1130
      %1284 = vmatpush.bf16.msra.mxu0 %v1129
      %1285 = vmatpush.bf16.msra.mxu0 %v1128
      %1286 = vmatpush.bf16.msra.mxu0 %v1127
      %1287 = vmatpush.bf16.msra.mxu0 %v1126
      %1288 = vmatpush.bf16.msra.mxu0 %v1125
      %1289 = vmatpush.bf16.msra.mxu0 %v1124
      %1290 = vmatpush.bf16.msra.mxu0 %v1123
      %1291 = vmatmul.bf16.gmra.mxu0 %v629
      %v1292 = vpop.f32.mrf.mxu0
      %v1293 = vadd.f32 %v801, %v1292
      %v1294 = vpop.f32.mrf.mxu0
      %1295 = vdwg.mxu0
      %1296 = vmatpush.bf16.msra.mxu0 %v1138
      %1297 = vmatpush.bf16.msra.mxu0 %v1137
      %1298 = vmatpush.bf16.msra.mxu0 %v1136
      %1299 = vmatpush.bf16.msra.mxu0 %v1135
      %1300 = vmatpush.bf16.msra.mxu0 %v1134
      %1301 = vmatpush.bf16.msra.mxu0 %v1133
      %1302 = vmatpush.bf16.msra.mxu0 %v1132
      %1303 = vmatpush.bf16.msra.mxu0 %v1131
      %1304 = vmatmul.bf16.gmra.mxu0 %v630
      %v1305 = vpop.f32.mrf.mxu0
      %v1306 = vadd.f32 %v1293, %v1305
      %v1307 = vpop.f32.mrf.mxu0
      %1308 = vdwg.mxu0
      %1309 = vmatpush.bf16.msra.mxu0 %v1146
      %1310 = vmatpush.bf16.msra.mxu0 %v1145
      %1311 = vmatpush.bf16.msra.mxu0 %v1144
      %1312 = vmatpush.bf16.msra.mxu0 %v1143
      %1313 = vmatpush.bf16.msra.mxu0 %v1142
      %1314 = vmatpush.bf16.msra.mxu0 %v1141
      %1315 = vmatpush.bf16.msra.mxu0 %v1140
      %1316 = vmatpush.bf16.msra.mxu0 %v1139
      %1317 = vmatmul.bf16.gmra.mxu0 %v631
      %v1318 = vpop.f32.mrf.mxu0
      %v1319 = vadd.f32 %v1306, %v1318
      %v1320 = vpop.f32.mrf.mxu0
      %1321 = vdwg.mxu0
      %1322 = vmatpush.bf16.msra.mxu0 %v1154
      %1323 = vmatpush.bf16.msra.mxu0 %v1153
      %1324 = vmatpush.bf16.msra.mxu0 %v1152
      %1325 = vmatpush.bf16.msra.mxu0 %v1151
      %1326 = vmatpush.bf16.msra.mxu0 %v1150
      %1327 = vmatpush.bf16.msra.mxu0 %v1149
      %1328 = vmatpush.bf16.msra.mxu0 %v1148
      %1329 = vmatpush.bf16.msra.mxu0 %v1147
      %1330 = vmatmul.bf16.gmra.mxu0 %v632
      %v1331 = vpop.f32.mrf.mxu0
      %v1332 = vadd.f32 %v1319, %v1331
      %v1333 = vpop.f32.mrf.mxu0
      %1334 = vdwg.mxu0
      %1335 = vmatpush.bf16.msra.mxu0 %v1162
      %1336 = vmatpush.bf16.msra.mxu0 %v1161
      %1337 = vmatpush.bf16.msra.mxu0 %v1160
      %1338 = vmatpush.bf16.msra.mxu0 %v1159
      %1339 = vmatpush.bf16.msra.mxu0 %v1158
      %1340 = vmatpush.bf16.msra.mxu0 %v1157
      %1341 = vmatpush.bf16.msra.mxu0 %v1156
      %1342 = vmatpush.bf16.msra.mxu0 %v1155
      %1343 = vmatmul.bf16.gmra.mxu0 %v633
      %v1344 = vpop.f32.mrf.mxu0
      %v1345 = vadd.f32 %v1332, %v1344
      %v1346 = vpop.f32.mrf.mxu0
      %1347 = vdwg.mxu0
      %1348 = vmatpush.bf16.msra.mxu0 %v1170
      %1349 = vmatpush.bf16.msra.mxu0 %v1169
      %1350 = vmatpush.bf16.msra.mxu0 %v1168
      %1351 = vmatpush.bf16.msra.mxu0 %v1167
      %1352 = vmatpush.bf16.msra.mxu0 %v1166
      %1353 = vmatpush.bf16.msra.mxu0 %v1165
      %1354 = vmatpush.bf16.msra.mxu0 %v1164
      %1355 = vmatpush.bf16.msra.mxu0 %v1163
      %1356 = vmatmul.bf16.gmra.mxu0 %v634
      %v1357 = vpop.f32.mrf.mxu0
      %v1358 = vadd.f32 %v1345, %v1357
      %v1359 = vpop.f32.mrf.mxu0
      %1360 = vdwg.mxu0
      %1361 = vmatpush.bf16.msra.mxu0 %v1178
      %1362 = vmatpush.bf16.msra.mxu0 %v1177
      %1363 = vmatpush.bf16.msra.mxu0 %v1176
      %1364 = vmatpush.bf16.msra.mxu0 %v1175
      %1365 = vmatpush.bf16.msra.mxu0 %v1174
      %1366 = vmatpush.bf16.msra.mxu0 %v1173
      %1367 = vmatpush.bf16.msra.mxu0 %v1172
      %1368 = vmatpush.bf16.msra.mxu0 %v1171
      %1369 = vmatmul.bf16.gmra.mxu0 %v635
      %v1370 = vpop.f32.mrf.mxu0
      %v1371 = vadd.f32 %v1358, %v1370
      %v1372 = vpop.f32.mrf.mxu0
      %1373 = vdwg.mxu0
      %1374 = vmatpush.bf16.msra.mxu0 %v1186
      %1375 = vmatpush.bf16.msra.mxu0 %v1185
      %1376 = vmatpush.bf16.msra.mxu0 %v1184
      %1377 = vmatpush.bf16.msra.mxu0 %v1183
      %1378 = vmatpush.bf16.msra.mxu0 %v1182
      %1379 = vmatpush.bf16.msra.mxu0 %v1181
      %1380 = vmatpush.bf16.msra.mxu0 %v1180
      %1381 = vmatpush.bf16.msra.mxu0 %v1179
      %1382 = vmatmul.bf16.gmra.mxu0 %v636
      %v1383 = vpop.f32.mrf.mxu0
      %v1384 = vadd.f32 %v1371, %v1383
      %v1385 = vpop.f32.mrf.mxu0
      %1386 = vdwg.mxu0
      %1387 = vmatpush.bf16.msra.mxu0 %v1194
      %1388 = vmatpush.bf16.msra.mxu0 %v1193
      %1389 = vmatpush.bf16.msra.mxu0 %v1192
      %1390 = vmatpush.bf16.msra.mxu0 %v1191
      %1391 = vmatpush.bf16.msra.mxu0 %v1190
      %1392 = vmatpush.bf16.msra.mxu0 %v1189
      %1393 = vmatpush.bf16.msra.mxu0 %v1188
      %1394 = vmatpush.bf16.msra.mxu0 %v1187
      %1395 = vmatmul.bf16.gmra.mxu0 %v637
      %v1396 = vpop.f32.mrf.mxu0
      %v1397 = vadd.f32 %v1384, %v1396
      %v1398 = vpop.f32.mrf.mxu0
      %1399 = vdwg.mxu0
      %1400 = vmatpush.bf16.msra.mxu0 %v1202
      %1401 = vmatpush.bf16.msra.mxu0 %v1201
      %1402 = vmatpush.bf16.msra.mxu0 %v1200
      %1403 = vmatpush.bf16.msra.mxu0 %v1199
      %1404 = vmatpush.bf16.msra.mxu0 %v1198
      %1405 = vmatpush.bf16.msra.mxu0 %v1197
      %1406 = vmatpush.bf16.msra.mxu0 %v1196
      %1407 = vmatpush.bf16.msra.mxu0 %v1195
      %1408 = vmatmul.bf16.gmra.mxu0 %v638
      %v1409 = vpop.f32.mrf.mxu0
      %v1410 = vadd.f32 %v1397, %v1409
      %v1411 = vpop.f32.mrf.mxu0
      %1412 = vdwg.mxu0
      %v1413 = vmax.f32 %v1410, 0.0
      %v1414 = vpack.c.bf16 %v1413, %v1413
      %v1415 = vld [vmem:[%s3] sm:$0xf]
      %v1416 = vld [vmem:[%s3 + $0x4] sm:$0xf]
      %v1417 = vld [vmem:[%s3 + $0x8] sm:$0xf]
      %v1418 = vld [vmem:[%s3 + $0xc] sm:$0xf]
      %v1419 = vld [vmem:[%s3 + $0x10] sm:$0xf]
      %v1420 = vld [vmem:[%s3 + $0x14] sm:$0xf]
      %v1421 = vld [vmem:[%s3 + $0x18] sm:$0xf]
      %v1422 = vld [vmem:[%s3 + $0x1c] sm:$0xf]
      %v1423 = vld [vmem:[%s4] sm:$0xf]
      %v1424 = vld [vmem:[%s4 + $0x4] sm:$0xf]
      %v1425 = vld [vmem:[%s4 + $0x8] sm:$0xf]
      %v1426 = vld [vmem:[%s4 + $0xc] sm:$0xf]
      %v1427 = vld [vmem:[%s4 + $0x10] sm:$0xf]
      %v1428 = vld [vmem:[%s4 + $0x14] sm:$0xf]
      %v1429 = vld [vmem:[%s4 + $0x18] sm:$0xf]
      %v1430 = vld [vmem:[%s4 + $0x1c] sm:$0xf]
      %v1431 = vld [vmem:[%s4 + $0x20] sm:$0xf]
      %v1432 = vld [vmem:[%s4 + $0x24] sm:$0xf]
      %v1433 = vld [vmem:[%s4 + $0x28] sm:$0xf]
      %v1434 = vld [vmem:[%s4 + $0x2c] sm:$0xf]
      %v1435 = vld [vmem:[%s4 + $0x30] sm:$0xf]
      %v1436 = vld [vmem:[%s4 + $0x34] sm:$0xf]
      %v1437 = vld [vmem:[%s4 + $0x38] sm:$0xf]
      %v1438 = vld [vmem:[%s4 + $0x3c] sm:$0xf]
      %v1439 = vld [vmem:[%s4 + $0x40] sm:$0xf]
      %v1440 = vld [vmem:[%s4 + $0x44] sm:$0xf]
      %v1441 = vld [vmem:[%s4 + $0x48] sm:$0xf]
      %v1442 = vld [vmem:[%s4 + $0x4c] sm:$0xf]
      %v1443 = vld [vmem:[%s4 + $0x50] sm:$0xf]
      %v1444 = vld [vmem:[%s4 + $0x54] sm:$0xf]
      %v1445 = vld [vmem:[%s4 + $0x58] sm:$0xf]
      %v1446 = vld [vmem:[%s4 + $0x5c] sm:$0xf]
      %v1447 = vld [vmem:[%s4 + $0x60] sm:$0xf]
      %v1448 = vld [vmem:[%s4 + $0x64] sm:$0xf]
      %v1449 = vld [vmem:[%s4 + $0x68] sm:$0xf]
      %v1450 = vld [vmem:[%s4 + $0x6c] sm:$0xf]
      %v1451 = vld [vmem:[%s4 + $0x70] sm:$0xf]
      %v1452 = vld [vmem:[%s4 + $0x74] sm:$0xf]
      %v1453 = vld [vmem:[%s4 + $0x78] sm:$0xf]
      %v1454 = vld [vmem:[%s4 + $0x7c] sm:$0xf]
      %v1455 = vld [vmem:[%s4 + $0x80] sm:$0xf]
      %v1456 = vld [vmem:[%s4 + $0x84] sm:$0xf]
      %v1457 = vld [vmem:[%s4 + $0x88] sm:$0xf]
      %v1458 = vld [vmem:[%s4 + $0x8c] sm:$0xf]
      %v1459 = vld [vmem:[%s4 + $0x90] sm:$0xf]
      %v1460 = vld [vmem:[%s4 + $0x94] sm:$0xf]
      %v1461 = vld [vmem:[%s4 + $0x98] sm:$0xf]
      %v1462 = vld [vmem:[%s4 + $0x9c] sm:$0xf]
      %v1463 = vld [vmem:[%s4 + $0xa0] sm:$0xf]
      %v1464 = vld [vmem:[%s4 + $0xa4] sm:$0xf]
      %v1465 = vld [vmem:[%s4 + $0xa8] sm:$0xf]
      %v1466 = vld [vmem:[%s4 + $0xac] sm:$0xf]
      %v1467 = vld [vmem:[%s4 + $0xb0] sm:$0xf]
      %v1468 = vld [vmem:[%s4 + $0xb4] sm:$0xf]
      %v1469 = vld [vmem:[%s4 + $0xb8] sm:$0xf]
      %v1470 = vld [vmem:[%s4 + $0xbc] sm:$0xf]
      %v1471 = vld [vmem:[%s4 + $0xc0] sm:$0xf]
      %v1472 = vld [vmem:[%s4 + $0xc4] sm:$0xf]
      %v1473 = vld [vmem:[%s4 + $0xc8] sm:$0xf]
      %v1474 = vld [vmem:[%s4 + $0xcc] sm:$0xf]
      %v1475 = vld [vmem:[%s4 + $0xd0] sm:$0xf]
      %v1476 = vld [vmem:[%s4 + $0xd4] sm:$0xf]
      %v1477 = vld [vmem:[%s4 + $0xd8] sm:$0xf]
      %v1478 = vld [vmem:[%s4 + $0xdc] sm:$0xf]
      %v1479 = vld [vmem:[%s4 + $0xe0] sm:$0xf]
      %v1480 = vld [vmem:[%s4 + $0xe4] sm:$0xf]
      %v1481 = vld [vmem:[%s4 + $0xe8] sm:$0xf]
      %v1482 = vld [vmem:[%s4 + $0xec] sm:$0xf]
      %v1483 = vld [vmem:[%s4 + $0xf0] sm:$0xf]
      %v1484 = vld [vmem:[%s4 + $0xf4] sm:$0xf]
      %v1485 = vld [vmem:[%s4 + $0xf8] sm:$0xf]
      %v1486 = vld [vmem:[%s4 + $0xfc] sm:$0xf]
      %v1487 = vld [vmem:[%s4 + $0x100] sm:$0xf]
      %v1488 = vld [vmem:[%s4 + $0x104] sm:$0xf]
      %v1489 = vld [vmem:[%s4 + $0x108] sm:$0xf]
      %v1490 = vld [vmem:[%s4 + $0x10c] sm:$0xf]
      %v1491 = vld [vmem:[%s4 + $0x110] sm:$0xf]
      %v1492 = vld [vmem:[%s4 + $0x114] sm:$0xf]
      %v1493 = vld [vmem:[%s4 + $0x118] sm:$0xf]
      %v1494 = vld [vmem:[%s4 + $0x11c] sm:$0xf]
      %v1495 = vld [vmem:[%s4 + $0x120] sm:$0xf]
      %v1496 = vld [vmem:[%s4 + $0x124] sm:$0xf]
      %v1497 = vld [vmem:[%s4 + $0x128] sm:$0xf]
      %v1498 = vld [vmem:[%s4 + $0x12c] sm:$0xf]
      %v1499 = vld [vmem:[%s4 + $0x130] sm:$0xf]
      %v1500 = vld [vmem:[%s4 + $0x134] sm:$0xf]
      %v1501 = vld [vmem:[%s4 + $0x138] sm:$0xf]
      %v1502 = vld [vmem:[%s4 + $0x13c] sm:$0xf]
      %v1503 = vld [vmem:[%s4 + $0x140] sm:$0xf]
      %v1504 = vld [vmem:[%s4 + $0x144] sm:$0xf]
      %v1505 = vld [vmem:[%s4 + $0x148] sm:$0xf]
      %v1506 = vld [vmem:[%s4 + $0x14c] sm:$0xf]
      %v1507 = vld [vmem:[%s4 + $0x150] sm:$0xf]
      %v1508 = vld [vmem:[%s4 + $0x154] sm:$0xf]
      %v1509 = vld [vmem:[%s4 + $0x158] sm:$0xf]
      %v1510 = vld [vmem:[%s4 + $0x15c] sm:$0xf]
      %v1511 = vld [vmem:[%s4 + $0x160] sm:$0xf]
      %v1512 = vld [vmem:[%s4 + $0x164] sm:$0xf]
      %v1513 = vld [vmem:[%s4 + $0x168] sm:$0xf]
      %v1514 = vld [vmem:[%s4 + $0x16c] sm:$0xf]
      %v1515 = vld [vmem:[%s4 + $0x170] sm:$0xf]
      %v1516 = vld [vmem:[%s4 + $0x174] sm:$0xf]
      %v1517 = vld [vmem:[%s4 + $0x178] sm:$0xf]
      %v1518 = vld [vmem:[%s4 + $0x17c] sm:$0xf]
      %v1519 = vld [vmem:[%s4 + $0x180] sm:$0xf]
      %v1520 = vld [vmem:[%s4 + $0x184] sm:$0xf]
      %v1521 = vld [vmem:[%s4 + $0x188] sm:$0xf]
      %v1522 = vld [vmem:[%s4 + $0x18c] sm:$0xf]
      %v1523 = vld [vmem:[%s4 + $0x190] sm:$0xf]
      %v1524 = vld [vmem:[%s4 + $0x194] sm:$0xf]
      %v1525 = vld [vmem:[%s4 + $0x198] sm:$0xf]
      %v1526 = vld [vmem:[%s4 + $0x19c] sm:$0xf]
      %v1527 = vld [vmem:[%s4 + $0x1a0] sm:$0xf]
      %v1528 = vld [vmem:[%s4 + $0x1a4] sm:$0xf]
      %v1529 = vld [vmem:[%s4 + $0x1a8] sm:$0xf]
      %v1530 = vld [vmem:[%s4 + $0x1ac] sm:$0xf]
      %v1531 = vld [vmem:[%s4 + $0x1b0] sm:$0xf]
      %v1532 = vld [vmem:[%s4 + $0x1b4] sm:$0xf]
      %v1533 = vld [vmem:[%s4 + $0x1b8] sm:$0xf]
      %v1534 = vld [vmem:[%s4 + $0x1bc] sm:$0xf]
      %v1535 = vld [vmem:[%s4 + $0x1c0] sm:$0xf]
      %v1536 = vld [vmem:[%s4 + $0x1c4] sm:$0xf]
      %v1537 = vld [vmem:[%s4 + $0x1c8] sm:$0xf]
      %v1538 = vld [vmem:[%s4 + $0x1cc] sm:$0xf]
      %v1539 = vld [vmem:[%s4 + $0x1d0] sm:$0xf]
      %v1540 = vld [vmem:[%s4 + $0x1d4] sm:$0xf]
      %v1541 = vld [vmem:[%s4 + $0x1d8] sm:$0xf]
      %v1542 = vld [vmem:[%s4 + $0x1dc] sm:$0xf]
      %v1543 = vld [vmem:[%s4 + $0x1e0] sm:$0xf]
      %v1544 = vld [vmem:[%s4 + $0x1e4] sm:$0xf]
      %v1545 = vld [vmem:[%s4 + $0x1e8] sm:$0xf]
      %v1546 = vld [vmem:[%s4 + $0x1ec] sm:$0xf]
      %v1547 = vld [vmem:[%s4 + $0x1f0] sm:$0xf]
      %v1548 = vld [vmem:[%s4 + $0x1f4] sm:$0xf]
      %v1549 = vld [vmem:[%s4 + $0x1f8] sm:$0xf]
      %v1550 = vld [vmem:[%s4 + $0x1fc] sm:$0xf]
      %v1551 = vld [vmem:[%s4 + $0x200] sm:$0xf]
      %v1552 = vld [vmem:[%s4 + $0x204] sm:$0xf]
      %v1553 = vld [vmem:[%s4 + $0x208] sm:$0xf]
      %v1554 = vld [vmem:[%s4 + $0x20c] sm:$0xf]
      %v1555 = vld [vmem:[%s4 + $0x210] sm:$0xf]
      %v1556 = vld [vmem:[%s4 + $0x214] sm:$0xf]
      %v1557 = vld [vmem:[%s4 + $0x218] sm:$0xf]
      %v1558 = vld [vmem:[%s4 + $0x21c] sm:$0xf]
      %v1559 = vld [vmem:[%s4 + $0x220] sm:$0xf]
      %v1560 = vld [vmem:[%s4 + $0x224] sm:$0xf]
      %v1561 = vld [vmem:[%s4 + $0x228] sm:$0xf]
      %v1562 = vld [vmem:[%s4 + $0x22c] sm:$0xf]
      %v1563 = vld [vmem:[%s4 + $0x230] sm:$0xf]
      %v1564 = vld [vmem:[%s4 + $0x234] sm:$0xf]
      %v1565 = vld [vmem:[%s4 + $0x238] sm:$0xf]
      %v1566 = vld [vmem:[%s4 + $0x23c] sm:$0xf]
      %v1567 = vld [vmem:[%s4 + $0x240] sm:$0xf]
      %v1568 = vld [vmem:[%s4 + $0x244] sm:$0xf]
      %v1569 = vld [vmem:[%s4 + $0x248] sm:$0xf]
      %v1570 = vld [vmem:[%s4 + $0x24c] sm:$0xf]
      %v1571 = vld [vmem:[%s4 + $0x250] sm:$0xf]
      %v1572 = vld [vmem:[%s4 + $0x254] sm:$0xf]
      %v1573 = vld [vmem:[%s4 + $0x258] sm:$0xf]
      %v1574 = vld [vmem:[%s4 + $0x25c] sm:$0xf]
      %v1575 = vld [vmem:[%s4 + $0x260] sm:$0xf]
      %v1576 = vld [vmem:[%s4 + $0x264] sm:$0xf]
      %v1577 = vld [vmem:[%s4 + $0x268] sm:$0xf]
      %v1578 = vld [vmem:[%s4 + $0x26c] sm:$0xf]
      %v1579 = vld [vmem:[%s4 + $0x270] sm:$0xf]
      %v1580 = vld [vmem:[%s4 + $0x274] sm:$0xf]
      %v1581 = vld [vmem:[%s4 + $0x278] sm:$0xf]
      %v1582 = vld [vmem:[%s4 + $0x27c] sm:$0xf]
      %v1743 = vunpack.c.l.b16 %v1423
      %v1744 = vunpack.c.l.b16 %v1424
      %v1745 = vunpack.c.l.b16 %v1425
      %v1746 = vunpack.c.l.b16 %v1426
      %v1747 = vunpack.c.l.b16 %v1427
      %v1748 = vunpack.c.l.b16 %v1428
      %v1749 = vunpack.c.l.b16 %v1429
      %v1750 = vunpack.c.l.b16 %v1430
      %v1751 = vunpack.c.l.b16 %v1431
      %v1752 = vunpack.c.l.b16 %v1432
      %v1753 = vunpack.c.l.b16 %v1433
      %v1754 = vunpack.c.l.b16 %v1434
      %v1755 = vunpack.c.l.b16 %v1435
      %v1756 = vunpack.c.l.b16 %v1436
      %v1757 = vunpack.c.l.b16 %v1437
      %v1758 = vunpack.c.l.b16 %v1438
      %v1759 = vunpack.c.l.b16 %v1439
      %v1760 = vunpack.c.l.b16 %v1440
      %v1761 = vunpack.c.l.b16 %v1441
      %v1762 = vunpack.c.l.b16 %v1442
      %v1763 = vunpack.c.l.b16 %v1443
      %v1764 = vunpack.c.l.b16 %v1444
      %v1765 = vunpack.c.l.b16 %v1445
      %v1766 = vunpack.c.l.b16 %v1446
      %v1767 = vunpack.c.l.b16 %v1447
      %v1768 = vunpack.c.l.b16 %v1448
      %v1769 = vunpack.c.l.b16 %v1449
      %v1770 = vunpack.c.l.b16 %v1450
      %v1771 = vunpack.c.l.b16 %v1451
      %v1772 = vunpack.c.l.b16 %v1452
      %v1773 = vunpack.c.l.b16 %v1453
      %v1774 = vunpack.c.l.b16 %v1454
      %v1775 = vunpack.c.l.b16 %v1455
      %v1776 = vunpack.c.l.b16 %v1456
      %v1777 = vunpack.c.l.b16 %v1457
      %v1778 = vunpack.c.l.b16 %v1458
      %v1779 = vunpack.c.l.b16 %v1459
      %v1780 = vunpack.c.l.b16 %v1460
      %v1781 = vunpack.c.l.b16 %v1461
      %v1782 = vunpack.c.l.b16 %v1462
      %v1783 = vunpack.c.l.b16 %v1463
      %v1784 = vunpack.c.l.b16 %v1464
      %v1785 = vunpack.c.l.b16 %v1465
      %v1786 = vunpack.c.l.b16 %v1466
      %v1787 = vunpack.c.l.b16 %v1467
      %v1788 = vunpack.c.l.b16 %v1468
      %v1789 = vunpack.c.l.b16 %v1469
      %v1790 = vunpack.c.l.b16 %v1470
      %v1791 = vunpack.c.l.b16 %v1471
      %v1792 = vunpack.c.l.b16 %v1472
      %v1793 = vunpack.c.l.b16 %v1473
      %v1794 = vunpack.c.l.b16 %v1474
      %v1795 = vunpack.c.l.b16 %v1475
      %v1796 = vunpack.c.l.b16 %v1476
      %v1797 = vunpack.c.l.b16 %v1477
      %v1798 = vunpack.c.l.b16 %v1478
      %v1799 = vunpack.c.l.b16 %v1479
      %v1800 = vunpack.c.l.b16 %v1480
      %v1801 = vunpack.c.l.b16 %v1481
      %v1802 = vunpack.c.l.b16 %v1482
      %v1803 = vunpack.c.l.b16 %v1483
      %v1804 = vunpack.c.l.b16 %v1484
      %v1805 = vunpack.c.l.b16 %v1485
      %v1806 = vunpack.c.l.b16 %v1486
      %v1807 = vunpack.c.l.b16 %v1487
      %v1808 = vunpack.c.l.b16 %v1488
      %v1809 = vunpack.c.l.b16 %v1489
      %v1810 = vunpack.c.l.b16 %v1490
      %v1811 = vunpack.c.l.b16 %v1491
      %v1812 = vunpack.c.l.b16 %v1492
      %v1813 = vunpack.c.l.b16 %v1493
      %v1814 = vunpack.c.l.b16 %v1494
      %v1815 = vunpack.c.l.b16 %v1495
      %v1816 = vunpack.c.l.b16 %v1496
      %v1817 = vunpack.c.l.b16 %v1497
      %v1818 = vunpack.c.l.b16 %v1498
      %v1819 = vunpack.c.l.b16 %v1499
      %v1820 = vunpack.c.l.b16 %v1500
      %v1821 = vunpack.c.l.b16 %v1501
      %v1822 = vunpack.c.l.b16 %v1502
      %v1823 = vunpack.c.l.b16 %v1503
      %v1824 = vunpack.c.l.b16 %v1504
      %v1825 = vunpack.c.l.b16 %v1505
      %v1826 = vunpack.c.l.b16 %v1506
      %v1827 = vunpack.c.l.b16 %v1507
      %v1828 = vunpack.c.l.b16 %v1508
      %v1829 = vunpack.c.l.b16 %v1509
      %v1830 = vunpack.c.l.b16 %v1510
      %v1831 = vunpack.c.l.b16 %v1511
      %v1832 = vunpack.c.l.b16 %v1512
      %v1833 = vunpack.c.l.b16 %v1513
      %v1834 = vunpack.c.l.b16 %v1514
      %v1835 = vunpack.c.l.b16 %v1515
      %v1836 = vunpack.c.l.b16 %v1516
      %v1837 = vunpack.c.l.b16 %v1517
      %v1838 = vunpack.c.l.b16 %v1518
      %v1839 = vunpack.c.l.b16 %v1519
      %v1840 = vunpack.c.l.b16 %v1520
      %v1841 = vunpack.c.l.b16 %v1521
      %v1842 = vunpack.c.l.b16 %v1522
      %v1843 = vunpack.c.l.b16 %v1523
      %v1844 = vunpack.c.l.b16 %v1524
      %v1845 = vunpack.c.l.b16 %v1525
      %v1846 = vunpack.c.l.b16 %v1526
      %v1847 = vunpack.c.l.b16 %v1527
      %v1848 = vunpack.c.l.b16 %v1528
      %v1849 = vunpack.c.l.b16 %v1529
      %v1850 = vunpack.c.l.b16 %v1530
      %v1851 = vunpack.c.l.b16 %v1531
      %v1852 = vunpack.c.l.b16 %v1532
      %v1853 = vunpack.c.l.b16 %v1533
      %v1854 = vunpack.c.l.b16 %v1534
      %v1855 = vunpack.c.l.b16 %v1535
      %v1856 = vunpack.c.l.b16 %v1536
      %v1857 = vunpack.c.l.b16 %v1537
      %v1858 = vunpack.c.l.b16 %v1538
      %v1859 = vunpack.c.l.b16 %v1539
      %v1860 = vunpack.c.l.b16 %v1540
      %v1861 = vunpack.c.l.b16 %v1541
      %v1862 = vunpack.c.l.b16 %v1542
      %v1863 = vunpack.c.l.b16 %v1543
      %v1864 = vunpack.c.l.b16 %v1544
      %v1865 = vunpack.c.l.b16 %v1545
      %v1866 = vunpack.c.l.b16 %v1546
      %v1867 = vunpack.c.l.b16 %v1547
      %v1868 = vunpack.c.l.b16 %v1548
      %v1869 = vunpack.c.l.b16 %v1549
      %v1870 = vunpack.c.l.b16 %v1550
      %v1871 = vunpack.c.l.b16 %v1551
      %v1872 = vunpack.c.l.b16 %v1552
      %v1873 = vunpack.c.l.b16 %v1553
      %v1874 = vunpack.c.l.b16 %v1554
      %v1875 = vunpack.c.l.b16 %v1555
      %v1876 = vunpack.c.l.b16 %v1556
      %v1877 = vunpack.c.l.b16 %v1557
      %v1878 = vunpack.c.l.b16 %v1558
      %v1879 = vunpack.c.l.b16 %v1559
      %v1880 = vunpack.c.l.b16 %v1560
      %v1881 = vunpack.c.l.b16 %v1561
      %v1882 = vunpack.c.l.b16 %v1562
      %v1883 = vunpack.c.l.b16 %v1563
      %v1884 = vunpack.c.l.b16 %v1564
      %v1885 = vunpack.c.l.b16 %v1565
      %v1886 = vunpack.c.l.b16 %v1566
      %v1887 = vunpack.c.l.b16 %v1567
      %v1888 = vunpack.c.l.b16 %v1568
      %v1889 = vunpack.c.l.b16 %v1569
      %v1890 = vunpack.c.l.b16 %v1570
      %v1891 = vunpack.c.l.b16 %v1571
      %v1892 = vunpack.c.l.b16 %v1572
      %v1893 = vunpack.c.l.b16 %v1573
      %v1894 = vunpack.c.l.b16 %v1574
      %v1895 = vunpack.c.l.b16 %v1575
      %v1896 = vunpack.c.l.b16 %v1576
      %v1897 = vunpack.c.l.b16 %v1577
      %v1898 = vunpack.c.l.b16 %v1578
      %v1899 = vunpack.c.l.b16 %v1579
      %v1900 = vunpack.c.l.b16 %v1580
      %v1901 = vunpack.c.l.b16 %v1581
      %v1902 = vunpack.c.l.b16 %v1582
      %v1903 = vpack.c.b16 %v1744, %v1743
      %v1904 = vpack.c.b16 %v1746, %v1745
      %v1905 = vpack.c.b16 %v1748, %v1747
      %v1906 = vpack.c.b16 %v1750, %v1749
      %v1907 = vpack.c.b16 %v1752, %v1751
      %v1908 = vpack.c.b16 %v1754, %v1753
      %v1909 = vpack.c.b16 %v1756, %v1755
      %v1910 = vpack.c.b16 %v1758, %v1757
      %v1911 = vpack.c.b16 %v1760, %v1759
      %v1912 = vpack.c.b16 %v1762, %v1761
      %v1913 = vpack.c.b16 %v1764, %v1763
      %v1914 = vpack.c.b16 %v1766, %v1765
      %v1915 = vpack.c.b16 %v1768, %v1767
      %v1916 = vpack.c.b16 %v1770, %v1769
      %v1917 = vpack.c.b16 %v1772, %v1771
      %v1918 = vpack.c.b16 %v1774, %v1773
      %v1919 = vpack.c.b16 %v1776, %v1775
      %v1920 = vpack.c.b16 %v1778, %v1777
      %v1921 = vpack.c.b16 %v1780, %v1779
      %v1922 = vpack.c.b16 %v1782, %v1781
      %v1923 = vpack.c.b16 %v1784, %v1783
      %v1924 = vpack.c.b16 %v1786, %v1785
      %v1925 = vpack.c.b16 %v1788, %v1787
      %v1926 = vpack.c.b16 %v1790, %v1789
      %v1927 = vpack.c.b16 %v1792, %v1791
      %v1928 = vpack.c.b16 %v1794, %v1793
      %v1929 = vpack.c.b16 %v1796, %v1795
      %v1930 = vpack.c.b16 %v1798, %v1797
      %v1931 = vpack.c.b16 %v1800, %v1799
      %v1932 = vpack.c.b16 %v1802, %v1801
      %v1933 = vpack.c.b16 %v1804, %v1803
      %v1934 = vpack.c.b16 %v1806, %v1805
      %v1935 = vpack.c.b16 %v1808, %v1807
      %v1936 = vpack.c.b16 %v1810, %v1809
      %v1937 = vpack.c.b16 %v1812, %v1811
      %v1938 = vpack.c.b16 %v1814, %v1813
      %v1939 = vpack.c.b16 %v1816, %v1815
      %v1940 = vpack.c.b16 %v1818, %v1817
      %v1941 = vpack.c.b16 %v1820, %v1819
      %v1942 = vpack.c.b16 %v1822, %v1821
      %v1943 = vpack.c.b16 %v1824, %v1823
      %v1944 = vpack.c.b16 %v1826, %v1825
      %v1945 = vpack.c.b16 %v1828, %v1827
      %v1946 = vpack.c.b16 %v1830, %v1829
      %v1947 = vpack.c.b16 %v1832, %v1831
      %v1948 = vpack.c.b16 %v1834, %v1833
      %v1949 = vpack.c.b16 %v1836, %v1835
      %v1950 = vpack.c.b16 %v1838, %v1837
      %v1951 = vpack.c.b16 %v1840, %v1839
      %v1952 = vpack.c.b16 %v1842, %v1841
      %v1953 = vpack.c.b16 %v1844, %v1843
      %v1954 = vpack.c.b16 %v1846, %v1845
      %v1955 = vpack.c.b16 %v1848, %v1847
      %v1956 = vpack.c.b16 %v1850, %v1849
      %v1957 = vpack.c.b16 %v1852, %v1851
      %v1958 = vpack.c.b16 %v1854, %v1853
      %v1959 = vpack.c.b16 %v1856, %v1855
      %v1960 = vpack.c.b16 %v1858, %v1857
      %v1961 = vpack.c.b16 %v1860, %v1859
      %v1962 = vpack.c.b16 %v1862, %v1861
      %v1963 = vpack.c.b16 %v1864, %v1863
      %v1964 = vpack.c.b16 %v1866, %v1865
      %v1965 = vpack.c.b16 %v1868, %v1867
      %v1966 = vpack.c.b16 %v1870, %v1869
      %v1967 = vpack.c.b16 %v1872, %v1871
      %v1968 = vpack.c.b16 %v1874, %v1873
      %v1969 = vpack.c.b16 %v1876, %v1875
      %v1970 = vpack.c.b16 %v1878, %v1877
      %v1971 = vpack.c.b16 %v1880, %v1879
      %v1972 = vpack.c.b16 %v1882, %v1881
      %v1973 = vpack.c.b16 %v1884, %v1883
      %v1974 = vpack.c.b16 %v1886, %v1885
      %v1975 = vpack.c.b16 %v1888, %v1887
      %v1976 = vpack.c.b16 %v1890, %v1889
      %v1977 = vpack.c.b16 %v1892, %v1891
      %v1978 = vpack.c.b16 %v1894, %v1893
      %v1979 = vpack.c.b16 %v1896, %v1895
      %v1980 = vpack.c.b16 %v1898, %v1897
      %v1981 = vpack.c.b16 %v1900, %v1899
      %v1982 = vpack.c.b16 %v1902, %v1901
      %2063 = vmatpush.bf16.msra.mxu0 %v1910
      %2064 = vmatpush.bf16.msra.mxu0 %v1909
      %2065 = vmatpush.bf16.msra.mxu0 %v1908
      %2066 = vmatpush.bf16.msra.mxu0 %v1907
      %2067 = vmatpush.bf16.msra.mxu0 %v1906
      %2068 = vmatpush.bf16.msra.mxu0 %v1905
      %2069 = vmatpush.bf16.msra.mxu0 %v1904
      %2070 = vmatpush.bf16.msra.mxu0 %v1903
      %2071 = vmatmul.bf16.gmra.mxu0 %v629
      %v2072 = vpop.f32.mrf.mxu0
      %v2073 = vadd.f32 0.0, %v2072
      %v2074 = vpop.f32.mrf.mxu0
      %2075 = vdwg.mxu0
      %2076 = vmatpush.bf16.msra.mxu0 %v1918
      %2077 = vmatpush.bf16.msra.mxu0 %v1917
      %2078 = vmatpush.bf16.msra.mxu0 %v1916
      %2079 = vmatpush.bf16.msra.mxu0 %v1915
      %2080 = vmatpush.bf16.msra.mxu0 %v1914
      %2081 = vmatpush.bf16.msra.mxu0 %v1913
      %2082 = vmatpush.bf16.msra.mxu0 %v1912
      %2083 = vmatpush.bf16.msra.mxu0 %v1911
      %2084 = vmatmul.bf16.gmra.mxu0 %v630
      %v2085 = vpop.f32.mrf.mxu0
      %v2086 = vadd.f32 %v2073, %v2085
      %v2087 = vpop.f32.mrf.mxu0
      %2088 = vdwg.mxu0
      %2089 = vmatpush.bf16.msra.mxu0 %v1926
      %2090 = vmatpush.bf16.msra.mxu0 %v1925
      %2091 = vmatpush.bf16.msra.mxu0 %v1924
      %2092 = vmatpush.bf16.msra.mxu0 %v1923
      %2093 = vmatpush.bf16.msra.mxu0 %v1922
      %2094 = vmatpush.bf16.msra.mxu0 %v1921
      %2095 = vmatpush.bf16.msra.mxu0 %v1920
      %2096 = vmatpush.bf16.msra.mxu0 %v1919
      %2097 = vmatmul.bf16.gmra.mxu0 %v631
      %v2098 = vpop.f32.mrf.mxu0
      %v2099 = vadd.f32 %v2086, %v2098
      %v2100 = vpop.f32.mrf.mxu0
      %2101 = vdwg.mxu0
      %2102 = vmatpush.bf16.msra.mxu0 %v1934
      %2103 = vmatpush.bf16.msra.mxu0 %v1933
      %2104 = vmatpush.bf16.msra.mxu0 %v1932
      %2105 = vmatpush.bf16.msra.mxu0 %v1931
      %2106 = vmatpush.bf16.msra.mxu0 %v1930
      %2107 = vmatpush.bf16.msra.mxu0 %v1929
      %2108 = vmatpush.bf16.msra.mxu0 %v1928
      %2109 = vmatpush.bf16.msra.mxu0 %v1927
      %2110 = vmatmul.bf16.gmra.mxu0 %v632
      %v2111 = vpop.f32.mrf.mxu0
      %v2112 = vadd.f32 %v2099, %v2111
      %v2113 = vpop.f32.mrf.mxu0
      %2114 = vdwg.mxu0
      %2115 = vmatpush.bf16.msra.mxu0 %v1942
      %2116 = vmatpush.bf16.msra.mxu0 %v1941
      %2117 = vmatpush.bf16.msra.mxu0 %v1940
      %2118 = vmatpush.bf16.msra.mxu0 %v1939
      %2119 = vmatpush.bf16.msra.mxu0 %v1938
      %2120 = vmatpush.bf16.msra.mxu0 %v1937
      %2121 = vmatpush.bf16.msra.mxu0 %v1936
      %2122 = vmatpush.bf16.msra.mxu0 %v1935
      %2123 = vmatmul.bf16.gmra.mxu0 %v633
      %v2124 = vpop.f32.mrf.mxu0
      %v2125 = vadd.f32 %v2112, %v2124
      %v2126 = vpop.f32.mrf.mxu0
      %2127 = vdwg.mxu0
      %2128 = vmatpush.bf16.msra.mxu0 %v1950
      %2129 = vmatpush.bf16.msra.mxu0 %v1949
      %2130 = vmatpush.bf16.msra.mxu0 %v1948
      %2131 = vmatpush.bf16.msra.mxu0 %v1947
      %2132 = vmatpush.bf16.msra.mxu0 %v1946
      %2133 = vmatpush.bf16.msra.mxu0 %v1945
      %2134 = vmatpush.bf16.msra.mxu0 %v1944
      %2135 = vmatpush.bf16.msra.mxu0 %v1943
      %2136 = vmatmul.bf16.gmra.mxu0 %v634
      %v2137 = vpop.f32.mrf.mxu0
      %v2138 = vadd.f32 %v2125, %v2137
      %v2139 = vpop.f32.mrf.mxu0
      %2140 = vdwg.mxu0
      %2141 = vmatpush.bf16.msra.mxu0 %v1958
      %2142 = vmatpush.bf16.msra.mxu0 %v1957
      %2143 = vmatpush.bf16.msra.mxu0 %v1956
      %2144 = vmatpush.bf16.msra.mxu0 %v1955
      %2145 = vmatpush.bf16.msra.mxu0 %v1954
      %2146 = vmatpush.bf16.msra.mxu0 %v1953
      %2147 = vmatpush.bf16.msra.mxu0 %v1952
      %2148 = vmatpush.bf16.msra.mxu0 %v1951
      %2149 = vmatmul.bf16.gmra.mxu0 %v635
      %v2150 = vpop.f32.mrf.mxu0
      %v2151 = vadd.f32 %v2138, %v2150
      %v2152 = vpop.f32.mrf.mxu0
      %2153 = vdwg.mxu0
      %2154 = vmatpush.bf16.msra.mxu0 %v1966
      %2155 = vmatpush.bf16.msra.mxu0 %v1965
      %2156 = vmatpush.bf16.msra.mxu0 %v1964
      %2157 = vmatpush.bf16.msra.mxu0 %v1963
      %2158 = vmatpush.bf16.msra.mxu0 %v1962
      %2159 = vmatpush.bf16.msra.mxu0 %v1961
      %2160 = vmatpush.bf16.msra.mxu0 %v1960
      %2161 = vmatpush.bf16.msra.mxu0 %v1959
      %2162 = vmatmul.bf16.gmra.mxu0 %v636
      %v2163 = vpop.f32.mrf.mxu0
      %v2164 = vadd.f32 %v2151, %v2163
      %v2165 = vpop.f32.mrf.mxu0
      %2166 = vdwg.mxu0
      %2167 = vmatpush.bf16.msra.mxu0 %v1974
      %2168 = vmatpush.bf16.msra.mxu0 %v1973
      %2169 = vmatpush.bf16.msra.mxu0 %v1972
      %2170 = vmatpush.bf16.msra.mxu0 %v1971
      %2171 = vmatpush.bf16.msra.mxu0 %v1970
      %2172 = vmatpush.bf16.msra.mxu0 %v1969
      %2173 = vmatpush.bf16.msra.mxu0 %v1968
      %2174 = vmatpush.bf16.msra.mxu0 %v1967
      %2175 = vmatmul.bf16.gmra.mxu0 %v637
      %v2176 = vpop.f32.mrf.mxu0
      %v2177 = vadd.f32 %v2164, %v2176
      %v2178 = vpop.f32.mrf.mxu0
      %2179 = vdwg.mxu0
      %2180 = vmatpush.bf16.msra.mxu0 %v1982
      %2181 = vmatpush.bf16.msra.mxu0 %v1981
      %2182 = vmatpush.bf16.msra.mxu0 %v1980
      %2183 = vmatpush.bf16.msra.mxu0 %v1979
      %2184 = vmatpush.bf16.msra.mxu0 %v1978
      %2185 = vmatpush.bf16.msra.mxu0 %v1977
      %2186 = vmatpush.bf16.msra.mxu0 %v1976
      %2187 = vmatpush.bf16.msra.mxu0 %v1975
      %2188 = vmatmul.bf16.gmra.mxu0 %v638
      %v2189 = vpop.f32.mrf.mxu0
      %v2190 = vadd.f32 %v2177, %v2189
      %v2191 = vpop.f32.mrf.mxu0
      %2192 = vdwg.mxu0
      %v2201 = vunpack.c.l.b16 %v1415
      %v2202 = vunpack.c.l.b16 %v1416
      %v2203 = vunpack.c.l.b16 %v1417
      %v2204 = vunpack.c.l.b16 %v1418
      %v2205 = vunpack.c.l.b16 %v1419
      %v2206 = vunpack.c.l.b16 %v1420
      %v2207 = vunpack.c.l.b16 %v1421
      %v2208 = vunpack.c.l.b16 %v1422
      %v2209 = vpack.c.b16 %v2202, %v2201
      %v2210 = vpack.c.b16 %v2204, %v2203
      %v2211 = vpack.c.b16 %v2206, %v2205
      %v2212 = vpack.c.b16 %v2208, %v2207
      %vm2217 = vcmask 523264
      %v2219 = vsel %vm2217, %v1414, 0
      %2221 = vmatpush.bf16.msra.mxu0 0
      %2222 = vmatpush.bf16.msra.mxu0 0
      %2223 = vmatpush.bf16.msra.mxu0 0
      %2224 = vmatpush.bf16.msra.mxu0 0
      %2225 = vmatpush.bf16.msra.mxu0 %v2212
      %2226 = vmatpush.bf16.msra.mxu0 %v2211
      %2227 = vmatpush.bf16.msra.mxu0 %v2210
      %2228 = vmatpush.bf16.msra.mxu0 %v2209
      %2229 = vmatmul.bf16.gmra.mxu0 %v2219
      %v2230 = vpop.f32.mrf.mxu0
      %v2231 = vadd.f32 %v2190, %v2230
      %v2232 = vpop.f32.mrf.mxu0
      %2233 = vdwg.mxu0
      %v2234 = vld [vmem:[%s5] sm:$0x1]
      %v2236 = vperm.slane %v2234, 0
      %v2238 = vadd.f32 %v2231, %v2236
      %2239 = vst [vmem:[#allocation3] sm:$0x3] %v2238
    $region33: #{tpu_custom_call.1} parent=1 // pred_fallthru
      _
    // Predicated region
    $region34: #{tpu_custom_call.1} parent=1 // pred_check
      _
    $region35: #{tpu_custom_call.1} parent=1 // pred_check_branch
      %2241 = sbr.rel (0) target = $region37
    $region36: #{tpu_custom_call.1} parent=1 // pred_region
      %2243 = vsyncadd [#allocation4], 0
      %s2245 = sshll.u32 [#allocation3], 4
      %s2246 = int_to_ptr.vmem [resolvable:$true] %s2245
      %s2247 = sshll.u32 %s6, 4
      %s2248 = int_to_ptr.hbm [resolvable:$true] %s2247
      %2250 = dma.vmem_to_hbm [thread:$0]  %s2246, 32, %s2248, [#allocation4]
    $region37: #{tpu_custom_call.1} parent=1 // pred_fallthru
      _
    // Predicated region
    $region38: #{tpu_custom_call.1} parent=1 // pred_check
      _
    $region39: #{tpu_custom_call.1} parent=1 // pred_check_branch
      %2252 = sbr.rel (0) target = $region41
    $region40: #{tpu_custom_call.1} parent=1 // pred_region
      %2254 = dma.done [#allocation4], 32
    $region41: #{tpu_custom_call.1} parent=1 // pred_fallthru
      _
    %2255 = vsyncpa [#allocation4], 1

</llo_original>
